<compile_context>
chip_gen: v5e
topology: v5e:2x2
jax: 0.10.0
libtpu: 0.0.40
codegen_flags: <defaults>
</compile_context>

<pallas_src>
import math

import jax
import jax.numpy as jnp
from jax import lax
from jax.experimental import pallas as pl
from jax.experimental.pallas import tpu as pltpu


# ---------------------------------------------------------------------------
# Fused decoder-layer kernel (one grid step = one batch element)
# ---------------------------------------------------------------------------
def _make_decoder_kernel(num_heads, eps=1e-5):
    def kernel(x_ref, enc_ref,
               wqkv1_ref, bqkv1_ref, wo1_ref,
               wq2_ref, wkv2_ref, bkv2_ref, wo2_ref,
               w1_ref, b1_ref, w2_ref,
               vecs_ref, o_ref):
        T = x_ref.shape[1]
        E = x_ref.shape[2]
        H = num_heads
        hd = E // H

        # Packed (1, E) vectors: biases + LayerNorm params.
        vecs = vecs_ref[...]                     # (10, E)
        bq2 = vecs[0:1]
        bo1 = vecs[1:2]
        bo2 = vecs[2:3]
        b2 = vecs[3:4]
        ln1_g, ln1_b = vecs[4:5], vecs[5:6]
        ln2_g, ln2_b = vecs[6:7], vecs[7:8]
        ln3_g, ln3_b = vecs[8:9], vecs[9:10]

        def layer_norm(y, g, b):
            mean = jnp.mean(y, axis=-1, keepdims=True)
            yc = y - mean
            var = jnp.mean(yc * yc, axis=-1, keepdims=True)
            return yc * lax.rsqrt(var + eps) * g + b

        def attention(q, k, v, wo_ref, bo, bias):
            # q: (T, E) (already scaled via weight prep), k/v: (S, E).
            # Static per-head loop of 2-D MXU matmuls; head outputs are
            # accumulated directly through row-slices of Wo (no lane concat).
            acc = None
            for h in range(H):
                lo = h * hd
                qs = q[:, lo:lo + hd]                                    # (T, hd)
                ks = k[:, lo:lo + hd]                                    # (S, hd)
                vs = v[:, lo:lo + hd]                                    # (S, hd)
                s = lax.dot_general(qs, ks, (((1,), (1,)), ((), ())),
                                    preferred_element_type=jnp.float32)  # (T, S)
                if bias is not None:
                    s = s + bias
                m = jnp.max(s, axis=-1, keepdims=True)
                p = jnp.exp(s - m)
                denom = jnp.sum(p, axis=-1, keepdims=True)
                p = p * pl.reciprocal(denom, approx=True)                # EUP slot
                ho = jnp.dot(p, vs, preferred_element_type=jnp.float32)  # (T, hd)
                contrib = jnp.dot(ho, wo_ref[lo:lo + hd, :],
                                  preferred_element_type=jnp.float32)    # (T, E)
                acc = contrib if acc is None else acc + contrib
            return acc + bo

        x = x_ref[0]                             # (T, E)
        enc = enc_ref[0]                         # (S_enc, E)

        # ---- self-attention (causal) + residual + LayerNorm 1 ------------
        qkv = jnp.dot(x, wqkv1_ref[...],
                      preferred_element_type=jnp.float32) + bqkv1_ref[...]
        q1, k1, v1 = qkv[:, :E], qkv[:, E:2 * E], qkv[:, 2 * E:]
        # Causal additive bias built once (hoisted out of the head loop).
        row = lax.broadcasted_iota(jnp.int32, (T, T), 0)
        col = lax.broadcasted_iota(jnp.int32, (T, T), 1)
        causal_bias = jnp.where(col > row, -1e30, 0.0).astype(jnp.float32)
        a1 = attention(q1, k1, v1, wo1_ref, bo1, causal_bias)
        x1 = layer_norm(x + a1, ln1_g, ln1_b)

        # ---- cross-attention + residual + LayerNorm 2 ---------------------
        q2 = jnp.dot(x1, wq2_ref[...],
                     preferred_element_type=jnp.float32) + bq2
        kv2 = jnp.dot(enc, wkv2_ref[...],
                      preferred_element_type=jnp.float32) + bkv2_ref[...]
        k2, v2 = kv2[:, :E], kv2[:, E:]
        a2 = attention(q2, k2, v2, wo2_ref, bo2, None)
        x2 = layer_norm(x1 + a2, ln2_g, ln2_b)

        # ---- FFN (Linear -> ReLU -> Linear) + residual + LayerNorm 3 ------
        h1 = jnp.dot(x2, w1_ref[...],
                     preferred_element_type=jnp.float32) + b1_ref[...]
        h1 = jnp.maximum(h1, 0.0)
        y = jnp.dot(h1, w2_ref[...],
                    preferred_element_type=jnp.float32) + b2
        o_ref[0] = layer_norm(x2 + y, ln3_g, ln3_b)

    return kernel


def transformer_decoder_pallas(inputs, encoder_outputs, p, *, num_heads):
    B, T, E = inputs.shape
    S = encoder_outputs.shape[1]
    D = p['w1'].shape[1]
    hd = E // num_heads
    scale = 1.0 / math.sqrt(hd)

    # ---- one-time host-side weight prep ---------------------------------
    # Fuse Q/K/V projections, fold the 1/sqrt(hd) attention scale into the
    # query projections, and pack all (1, E) vectors into one (10, E) slab.
    wqkv1 = jnp.concatenate([p['wq1'] * scale, p['wk1'], p['wv1']], axis=1)  # (E,3E)
    bqkv1 = jnp.concatenate([p['bq1'] * scale, p['bk1'], p['bv1']], axis=1)  # (1,3E)
    wq2 = p['wq2'] * scale                                                   # (E,E)
    wkv2 = jnp.concatenate([p['wk2'], p['wv2']], axis=1)                     # (E,2E)
    bkv2 = jnp.concatenate([p['bk2'], p['bv2']], axis=1)                     # (1,2E)
    vecs = jnp.concatenate([p['bq2'] * scale, p['bo1'], p['bo2'], p['b2'],
                            p['ln1_g'], p['ln1_b'],
                            p['ln2_g'], p['ln2_b'],
                            p['ln3_g'], p['ln3_b']], axis=0)                 # (10,E)

    kernel = _make_decoder_kernel(num_heads)

    def cspec(shape):
        return pl.BlockSpec(shape, lambda b: (0, 0))

    return pl.pallas_call(
        kernel,
        out_shape=jax.ShapeDtypeStruct((B, T, E), jnp.float32),
        grid_spec=pltpu.PrefetchScalarGridSpec(
            num_scalar_prefetch=0,
            grid=(B,),
            in_specs=[
                pl.BlockSpec((1, T, E), lambda b: (b, 0, 0)),   # decoder inputs
                pl.BlockSpec((1, S, E), lambda b: (b, 0, 0)),   # encoder outputs
                cspec((E, 3 * E)), cspec((1, 3 * E)), cspec((E, E)),   # self-attn
                cspec((E, E)), cspec((E, 2 * E)),
                cspec((1, 2 * E)), cspec((E, E)),                      # cross-attn
                cspec((E, D)), cspec((1, D)), cspec((D, E)),           # FFN
                cspec((10, E)),                                        # packed vectors
            ],
            out_specs=pl.BlockSpec((1, T, E), lambda b: (b, 0, 0)),
        ),
        compiler_params=pltpu.CompilerParams(
            dimension_semantics=("parallel",)),
    )(inputs, encoder_outputs,
      wqkv1, bqkv1, p['wo1'],
      wq2, wkv2, bkv2, p['wo2'],
      p['w1'], p['b1'], p['w2'],
      vecs)


# ---------------------------------------------------------------------------
# Pure-JAX reference (same weights) for correctness checking
# ---------------------------------------------------------------------------
def _mha_ref(x_q, x_kv, wq, wk, wv, bq, bk, bv, wo, bo, *, num_heads, causal):
    B, T, E = x_q.shape
    S = x_kv.shape[1]
    hd = E // num_heads
    hp = lax.Precision.HIGHEST
    q = jnp.einsum('bte,ef->btf', x_q, wq, precision=hp) + bq
    k = jnp.einsum('bse,ef->bsf', x_kv, wk, precision=hp) + bk
    v = jnp.einsum('bse,ef->bsf', x_kv, wv, precision=hp) + bv
    q = q.reshape(B, T, num_heads, hd)
    k = k.reshape(B, S, num_heads, hd)
    v = v.reshape(B, S, num_heads, hd)
    s = jnp.einsum('bthd,bshd->bhts', q, k, precision=hp) / math.sqrt(hd)
    if causal:
        mask = jnp.triu(jnp.ones((T, S), bool), 1)
        s = jnp.where(mask[None, None], -1e30, s)
    pmat = jax.nn.softmax(s, axis=-1)
    o = jnp.einsum('bhts,bshd->bthd', pmat, v, precision=hp).reshape(B, T, E)
    return jnp.einsum('bte,ef->btf', o, wo, precision=hp) + bo


def _ln_ref(x, gamma, beta, eps=1e-5):
    mean = x.mean(-1, keepdims=True)
    var = ((x - mean) ** 2).mean(-1, keepdims=True)
    return (x - mean) / jnp.sqrt(var + eps) * gamma + beta


def transformer_decoder_ref(inputs, enc, p, *, num_heads):
    a1 = _mha_ref(inputs, inputs, p['wq1'], p['wk1'], p['wv1'],
                  p['bq1'], p['bk1'], p['bv1'], p['wo1'], p['bo1'],
                  num_heads=num_heads, causal=True)
    x1 = _ln_ref(inputs + a1, p['ln1_g'], p['ln1_b'])
    a2 = _mha_ref(x1, enc, p['wq2'], p['wk2'], p['wv2'],
                  p['bq2'], p['bk2'], p['bv2'], p['wo2'], p['bo2'],
                  num_heads=num_heads, causal=False)
    x2 = _ln_ref(x1 + a2, p['ln2_g'], p['ln2_b'])
    hp = lax.Precision.HIGHEST
    h = jnp.maximum(jnp.einsum('bte,ed->btd', x2, p['w1'], precision=hp) + p['b1'], 0.0)
    y = jnp.einsum('btd,de->bte', h, p['w2'], precision=hp) + p['b2']
    return _ln_ref(x2 + y, p['ln3_g'], p['ln3_b'])


# ---------------------------------------------------------------------------
if __name__ == "__main__":
    # Small shapes consistent with the module's forward.
    embed_dim, dense_dim, num_heads, seq_length = 32, 64, 4, 8
    B, T, S_enc = 2, seq_length, 16
    E, D = embed_dim, dense_dim

    key = jax.random.PRNGKey(0)
    ks = iter(jax.random.split(key, 40))

    def nrm(shape, scale=0.1):
        return scale * jax.random.normal(next(ks), shape, jnp.float32)

    params = {}
    for tag in ('1', '2'):
        params['wq' + tag] = nrm((E, E))
        params['wk' + tag] = nrm((E, E))
        params['wv' + tag] = nrm((E, E))
        params['bq' + tag] = nrm((1, E))
        params['bk' + tag] = nrm((1, E))
        params['bv' + tag] = nrm((1, E))
        params['wo' + tag] = nrm((E, E))
        params['bo' + tag] = nrm((1, E))
    params['w1'] = nrm((E, D))
    params['b1'] = nrm((1, D))
    params['w2'] = nrm((D, E))
    params['b2'] = nrm((1, E))
    for i in ('1', '2', '3'):
        params['ln%s_g' % i] = 1.0 + nrm((1, E))
        params['ln%s_b' % i] = nrm((1, E))

    inputs = jax.random.normal(next(ks), (B, T, E), jnp.float32)
    encoder_outputs = jax.random.normal(next(ks), (B, S_enc, E), jnp.float32)

    out = transformer_decoder_pallas(inputs, encoder_outputs, params,
                                     num_heads=num_heads)
    out = jax.block_until_ready(out)

    ref = transformer_decoder_ref(inputs, encoder_outputs, params,
                                  num_heads=num_heads)

    assert out.shape == (B, T, E)
    assert out.dtype == jnp.float32
    assert jnp.allclose(out, ref, atol=2e-3, rtol=2e-3), (
        float(jnp.max(jnp.abs(out - ref))))

    print("KERNEL_OK")
</pallas_src>

<mosaic_0001>
module attributes {stable_mosaic.version = 11 : i64} {
  func.func @kernel(%arg0: i32, %arg1: memref<1x8x32xf32, #tpu.memory_space<vmem>>, %arg2: memref<1x16x32xf32, #tpu.memory_space<vmem>>, %arg3: memref<32x96xf32, #tpu.memory_space<vmem>>, %arg4: memref<1x96xf32, #tpu.memory_space<vmem>>, %arg5: memref<32x32xf32, #tpu.memory_space<vmem>>, %arg6: memref<32x32xf32, #tpu.memory_space<vmem>>, %arg7: memref<32x64xf32, #tpu.memory_space<vmem>>, %arg8: memref<1x64xf32, #tpu.memory_space<vmem>>, %arg9: memref<32x32xf32, #tpu.memory_space<vmem>>, %arg10: memref<32x64xf32, #tpu.memory_space<vmem>>, %arg11: memref<1x64xf32, #tpu.memory_space<vmem>>, %arg12: memref<64x32xf32, #tpu.memory_space<vmem>>, %arg13: memref<10x32xf32, #tpu.memory_space<vmem>>, %arg14: memref<1x8x32xf32, #tpu.memory_space<vmem>>) attributes {dimension_semantics = [#tpu.dimension_semantics<parallel>], iteration_bounds = array<i64: 2>, scalar_prefetch = 0 : i64, scratch_operands = 0 : i64, tpu.core_type = #tpu.core_type<tc>, window_params = [{transform_indices = @transform_0, window_bounds = array<i64: 1, 8, 32>}, {transform_indices = @transform_1, window_bounds = array<i64: 1, 16, 32>}, {pipeline_mode = #tpu.pipeline_mode<synchronous>, transform_indices = @transform_2, window_bounds = array<i64: 32, 96>}, {pipeline_mode = #tpu.pipeline_mode<synchronous>, transform_indices = @transform_3, window_bounds = array<i64: 1, 96>}, {pipeline_mode = #tpu.pipeline_mode<synchronous>, transform_indices = @transform_4, window_bounds = array<i64: 32, 32>}, {pipeline_mode = #tpu.pipeline_mode<synchronous>, transform_indices = @transform_5, window_bounds = array<i64: 32, 32>}, {pipeline_mode = #tpu.pipeline_mode<synchronous>, transform_indices = @transform_6, window_bounds = array<i64: 32, 64>}, {pipeline_mode = #tpu.pipeline_mode<synchronous>, transform_indices = @transform_7, window_bounds = array<i64: 1, 64>}, {pipeline_mode = #tpu.pipeline_mode<synchronous>, transform_indices = @transform_8, window_bounds = array<i64: 32, 32>}, {pipeline_mode = #tpu.pipeline_mode<synchronous>, transform_indices = @transform_9, window_bounds = array<i64: 32, 64>}, {pipeline_mode = #tpu.pipeline_mode<synchronous>, transform_indices = @transform_10, window_bounds = array<i64: 1, 64>}, {pipeline_mode = #tpu.pipeline_mode<synchronous>, transform_indices = @transform_11, window_bounds = array<i64: 64, 32>}, {pipeline_mode = #tpu.pipeline_mode<synchronous>, transform_indices = @transform_12, window_bounds = array<i64: 10, 32>}, {transform_indices = @transform_13, window_bounds = array<i64: 1, 8, 32>}]} {
    %c0 = arith.constant 0 : index
    %c0_0 = arith.constant 0 : index
    %0 = vector.load %arg13[%c0, %c0_0] : memref<10x32xf32, #tpu.memory_space<vmem>>, vector<10x32xf32>
    %1 = vector.extract_strided_slice %0 {offsets = [0, 0], sizes = [1, 32], strides = [1, 1]} : vector<10x32xf32> to vector<1x32xf32>
    %2 = vector.extract_strided_slice %0 {offsets = [1, 0], sizes = [1, 32], strides = [1, 1]} : vector<10x32xf32> to vector<1x32xf32>
    %3 = vector.extract_strided_slice %0 {offsets = [2, 0], sizes = [1, 32], strides = [1, 1]} : vector<10x32xf32> to vector<1x32xf32>
    %4 = vector.extract_strided_slice %0 {offsets = [3, 0], sizes = [1, 32], strides = [1, 1]} : vector<10x32xf32> to vector<1x32xf32>
    %5 = vector.extract_strided_slice %0 {offsets = [4, 0], sizes = [1, 32], strides = [1, 1]} : vector<10x32xf32> to vector<1x32xf32>
    %6 = vector.extract_strided_slice %0 {offsets = [5, 0], sizes = [1, 32], strides = [1, 1]} : vector<10x32xf32> to vector<1x32xf32>
    %7 = vector.extract_strided_slice %0 {offsets = [6, 0], sizes = [1, 32], strides = [1, 1]} : vector<10x32xf32> to vector<1x32xf32>
    %8 = vector.extract_strided_slice %0 {offsets = [7, 0], sizes = [1, 32], strides = [1, 1]} : vector<10x32xf32> to vector<1x32xf32>
    %9 = vector.extract_strided_slice %0 {offsets = [8, 0], sizes = [1, 32], strides = [1, 1]} : vector<10x32xf32> to vector<1x32xf32>
    %10 = vector.extract_strided_slice %0 {offsets = [9, 0], sizes = [1, 32], strides = [1, 1]} : vector<10x32xf32> to vector<1x32xf32>
    %c0_1 = arith.constant 0 : index
    %c0_2 = arith.constant 0 : index
    %c0_3 = arith.constant 0 : index
    %11 = vector.load %arg1[%c0_1, %c0_2, %c0_3] : memref<1x8x32xf32, #tpu.memory_space<vmem>>, vector<1x8x32xf32>
    %12 = vector.shape_cast %11 : vector<1x8x32xf32> to vector<8x32xf32>
    %c0_4 = arith.constant 0 : index
    %c0_5 = arith.constant 0 : index
    %c0_6 = arith.constant 0 : index
    %13 = vector.load %arg2[%c0_4, %c0_5, %c0_6] : memref<1x16x32xf32, #tpu.memory_space<vmem>>, vector<1x16x32xf32>
    %14 = vector.shape_cast %13 : vector<1x16x32xf32> to vector<16x32xf32>
    %c0_7 = arith.constant 0 : index
    %c0_8 = arith.constant 0 : index
    %15 = vector.load %arg3[%c0_7, %c0_8] : memref<32x96xf32, #tpu.memory_space<vmem>>, vector<32x96xf32>
    %cst = arith.constant dense<0.000000e+00> : vector<8x96xf32>
    %16 = tpu.matmul %12, %15, %cst {dimension_numbers = #tpu.dot_dimension_numbers<[1], [0], [0], [1], [0, 0, 1, 1], [], []>} : vector<8x32xf32>, vector<32x96xf32>, vector<8x96xf32> -> vector<8x96xf32>
    %c0_9 = arith.constant 0 : index
    %c0_10 = arith.constant 0 : index
    %17 = vector.load %arg4[%c0_9, %c0_10] : memref<1x96xf32, #tpu.memory_space<vmem>>, vector<1x96xf32>
    %18 = vector.broadcast %17 : vector<1x96xf32> to vector<8x96xf32>
    %19 = arith.addf %16, %18 : vector<8x96xf32>
    %20 = vector.extract_strided_slice %19 {offsets = [0, 0], sizes = [8, 32], strides = [1, 1]} : vector<8x96xf32> to vector<8x32xf32>
    %21 = vector.extract_strided_slice %19 {offsets = [0, 32], sizes = [8, 32], strides = [1, 1]} : vector<8x96xf32> to vector<8x32xf32>
    %22 = vector.extract_strided_slice %19 {offsets = [0, 64], sizes = [8, 32], strides = [1, 1]} : vector<8x96xf32> to vector<8x32xf32>
    %23 = tpu.iota {dimensions = array<i32: 0>} : vector<8x8xi32>
    %24 = tpu.iota {dimensions = array<i32: 1>} : vector<8x8xi32>
    %25 = arith.cmpi sgt, %24, %23 : vector<8x8xi32>
    %cst_11 = arith.constant -1.000000e+30 : f32
    %cst_12 = arith.constant 0.000000e+00 : f32
    %26 = vector.broadcast %cst_11 : f32 to vector<8x8xf32>
    %27 = vector.broadcast %cst_12 : f32 to vector<8x8xf32>
    %28 = arith.select %25, %26, %27 : vector<8x8xi1>, vector<8x8xf32>
    %29 = vector.extract_strided_slice %20 {offsets = [0, 0], sizes = [8, 8], strides = [1, 1]} : vector<8x32xf32> to vector<8x8xf32>
    %30 = vector.extract_strided_slice %21 {offsets = [0, 0], sizes = [8, 8], strides = [1, 1]} : vector<8x32xf32> to vector<8x8xf32>
    %31 = vector.extract_strided_slice %22 {offsets = [0, 0], sizes = [8, 8], strides = [1, 1]} : vector<8x32xf32> to vector<8x8xf32>
    %cst_13 = arith.constant dense<0.000000e+00> : vector<8x8xf32>
    %32 = tpu.matmul %29, %30, %cst_13 {dimension_numbers = #tpu.dot_dimension_numbers<[1], [1], [0], [0], [0, 0, 1, 0], [], []>} : vector<8x8xf32>, vector<8x8xf32>, vector<8x8xf32> -> vector<8x8xf32>
    %33 = arith.addf %32, %28 : vector<8x8xf32>
    %cst_14 = arith.constant dense<0xFF800000> : vector<8xf32>
    %34 = vector.multi_reduction <maximumf>, %33, %cst_14 [1] : vector<8x8xf32> to vector<8xf32>
    %35 = vector.shape_cast %34 : vector<8xf32> to vector<8x1xf32>
    %36 = vector.broadcast %35 : vector<8x1xf32> to vector<8x8xf32>
    %37 = arith.subf %33, %36 : vector<8x8xf32>
    %38 = math.exp %37 : vector<8x8xf32>
    %cst_15 = arith.constant dense<0.000000e+00> : vector<8xf32>
    %39 = vector.multi_reduction <add>, %38, %cst_15 [1] : vector<8x8xf32> to vector<8xf32>
    %40 = vector.shape_cast %39 : vector<8xf32> to vector<8x1xf32>
    %41 = tpu.reciprocal %40 {approx = true} : vector<8x1xf32> -> vector<8x1xf32>
    %42 = vector.broadcast %41 : vector<8x1xf32> to vector<8x8xf32>
    %43 = arith.mulf %38, %42 : vector<8x8xf32>
    %cst_16 = arith.constant dense<0.000000e+00> : vector<8x8xf32>
    %44 = tpu.matmul %43, %31, %cst_16 {dimension_numbers = #tpu.dot_dimension_numbers<[1], [0], [0], [1], [0, 0, 1, 1], [], []>} : vector<8x8xf32>, vector<8x8xf32>, vector<8x8xf32> -> vector<8x8xf32>
    %c0_17 = arith.constant 0 : index
    %c0_18 = arith.constant 0 : index
    %45 = vector.load %arg5[%c0_17, %c0_18] : memref<32x32xf32, #tpu.memory_space<vmem>>, vector<8x32xf32>
    %cst_19 = arith.constant dense<0.000000e+00> : vector<8x32xf32>
    %46 = tpu.matmul %44, %45, %cst_19 {dimension_numbers = #tpu.dot_dimension_numbers<[1], [0], [0], [1], [0, 0, 1, 1], [], []>} : vector<8x8xf32>, vector<8x32xf32>, vector<8x32xf32> -> vector<8x32xf32>
    %47 = vector.extract_strided_slice %20 {offsets = [0, 8], sizes = [8, 8], strides = [1, 1]} : vector<8x32xf32> to vector<8x8xf32>
    %48 = vector.extract_strided_slice %21 {offsets = [0, 8], sizes = [8, 8], strides = [1, 1]} : vector<8x32xf32> to vector<8x8xf32>
    %49 = vector.extract_strided_slice %22 {offsets = [0, 8], sizes = [8, 8], strides = [1, 1]} : vector<8x32xf32> to vector<8x8xf32>
    %cst_20 = arith.constant dense<0.000000e+00> : vector<8x8xf32>
    %50 = tpu.matmul %47, %48, %cst_20 {dimension_numbers = #tpu.dot_dimension_numbers<[1], [1], [0], [0], [0, 0, 1, 0], [], []>} : vector<8x8xf32>, vector<8x8xf32>, vector<8x8xf32> -> vector<8x8xf32>
    %51 = arith.addf %50, %28 : vector<8x8xf32>
    %cst_21 = arith.constant dense<0xFF800000> : vector<8xf32>
    %52 = vector.multi_reduction <maximumf>, %51, %cst_21 [1] : vector<8x8xf32> to vector<8xf32>
    %53 = vector.shape_cast %52 : vector<8xf32> to vector<8x1xf32>
    %54 = vector.broadcast %53 : vector<8x1xf32> to vector<8x8xf32>
    %55 = arith.subf %51, %54 : vector<8x8xf32>
    %56 = math.exp %55 : vector<8x8xf32>
    %cst_22 = arith.constant dense<0.000000e+00> : vector<8xf32>
    %57 = vector.multi_reduction <add>, %56, %cst_22 [1] : vector<8x8xf32> to vector<8xf32>
    %58 = vector.shape_cast %57 : vector<8xf32> to vector<8x1xf32>
    %59 = tpu.reciprocal %58 {approx = true} : vector<8x1xf32> -> vector<8x1xf32>
    %60 = vector.broadcast %59 : vector<8x1xf32> to vector<8x8xf32>
    %61 = arith.mulf %56, %60 : vector<8x8xf32>
    %cst_23 = arith.constant dense<0.000000e+00> : vector<8x8xf32>
    %62 = tpu.matmul %61, %49, %cst_23 {dimension_numbers = #tpu.dot_dimension_numbers<[1], [0], [0], [1], [0, 0, 1, 1], [], []>} : vector<8x8xf32>, vector<8x8xf32>, vector<8x8xf32> -> vector<8x8xf32>
    %c8 = arith.constant 8 : index
    %c0_24 = arith.constant 0 : index
    %63 = vector.load %arg5[%c8, %c0_24] : memref<32x32xf32, #tpu.memory_space<vmem>>, vector<8x32xf32>
    %cst_25 = arith.constant dense<0.000000e+00> : vector<8x32xf32>
    %64 = tpu.matmul %62, %63, %cst_25 {dimension_numbers = #tpu.dot_dimension_numbers<[1], [0], [0], [1], [0, 0, 1, 1], [], []>} : vector<8x8xf32>, vector<8x32xf32>, vector<8x32xf32> -> vector<8x32xf32>
    %65 = arith.addf %46, %64 : vector<8x32xf32>
    %66 = vector.extract_strided_slice %20 {offsets = [0, 16], sizes = [8, 8], strides = [1, 1]} : vector<8x32xf32> to vector<8x8xf32>
    %67 = vector.extract_strided_slice %21 {offsets = [0, 16], sizes = [8, 8], strides = [1, 1]} : vector<8x32xf32> to vector<8x8xf32>
    %68 = vector.extract_strided_slice %22 {offsets = [0, 16], sizes = [8, 8], strides = [1, 1]} : vector<8x32xf32> to vector<8x8xf32>
    %cst_26 = arith.constant dense<0.000000e+00> : vector<8x8xf32>
    %69 = tpu.matmul %66, %67, %cst_26 {dimension_numbers = #tpu.dot_dimension_numbers<[1], [1], [0], [0], [0, 0, 1, 0], [], []>} : vector<8x8xf32>, vector<8x8xf32>, vector<8x8xf32> -> vector<8x8xf32>
    %70 = arith.addf %69, %28 : vector<8x8xf32>
    %cst_27 = arith.constant dense<0xFF800000> : vector<8xf32>
    %71 = vector.multi_reduction <maximumf>, %70, %cst_27 [1] : vector<8x8xf32> to vector<8xf32>
    %72 = vector.shape_cast %71 : vector<8xf32> to vector<8x1xf32>
    %73 = vector.broadcast %72 : vector<8x1xf32> to vector<8x8xf32>
    %74 = arith.subf %70, %73 : vector<8x8xf32>
    %75 = math.exp %74 : vector<8x8xf32>
    %cst_28 = arith.constant dense<0.000000e+00> : vector<8xf32>
    %76 = vector.multi_reduction <add>, %75, %cst_28 [1] : vector<8x8xf32> to vector<8xf32>
    %77 = vector.shape_cast %76 : vector<8xf32> to vector<8x1xf32>
    %78 = tpu.reciprocal %77 {approx = true} : vector<8x1xf32> -> vector<8x1xf32>
    %79 = vector.broadcast %78 : vector<8x1xf32> to vector<8x8xf32>
    %80 = arith.mulf %75, %79 : vector<8x8xf32>
    %cst_29 = arith.constant dense<0.000000e+00> : vector<8x8xf32>
    %81 = tpu.matmul %80, %68, %cst_29 {dimension_numbers = #tpu.dot_dimension_numbers<[1], [0], [0], [1], [0, 0, 1, 1], [], []>} : vector<8x8xf32>, vector<8x8xf32>, vector<8x8xf32> -> vector<8x8xf32>
    %c16 = arith.constant 16 : index
    %c0_30 = arith.constant 0 : index
    %82 = vector.load %arg5[%c16, %c0_30] : memref<32x32xf32, #tpu.memory_space<vmem>>, vector<8x32xf32>
    %cst_31 = arith.constant dense<0.000000e+00> : vector<8x32xf32>
    %83 = tpu.matmul %81, %82, %cst_31 {dimension_numbers = #tpu.dot_dimension_numbers<[1], [0], [0], [1], [0, 0, 1, 1], [], []>} : vector<8x8xf32>, vector<8x32xf32>, vector<8x32xf32> -> vector<8x32xf32>
    %84 = arith.addf %65, %83 : vector<8x32xf32>
    %85 = vector.extract_strided_slice %20 {offsets = [0, 24], sizes = [8, 8], strides = [1, 1]} : vector<8x32xf32> to vector<8x8xf32>
    %86 = vector.extract_strided_slice %21 {offsets = [0, 24], sizes = [8, 8], strides = [1, 1]} : vector<8x32xf32> to vector<8x8xf32>
    %87 = vector.extract_strided_slice %22 {offsets = [0, 24], sizes = [8, 8], strides = [1, 1]} : vector<8x32xf32> to vector<8x8xf32>
    %cst_32 = arith.constant dense<0.000000e+00> : vector<8x8xf32>
    %88 = tpu.matmul %85, %86, %cst_32 {dimension_numbers = #tpu.dot_dimension_numbers<[1], [1], [0], [0], [0, 0, 1, 0], [], []>} : vector<8x8xf32>, vector<8x8xf32>, vector<8x8xf32> -> vector<8x8xf32>
    %89 = arith.addf %88, %28 : vector<8x8xf32>
    %cst_33 = arith.constant dense<0xFF800000> : vector<8xf32>
    %90 = vector.multi_reduction <maximumf>, %89, %cst_33 [1] : vector<8x8xf32> to vector<8xf32>
    %91 = vector.shape_cast %90 : vector<8xf32> to vector<8x1xf32>
    %92 = vector.broadcast %91 : vector<8x1xf32> to vector<8x8xf32>
    %93 = arith.subf %89, %92 : vector<8x8xf32>
    %94 = math.exp %93 : vector<8x8xf32>
    %cst_34 = arith.constant dense<0.000000e+00> : vector<8xf32>
    %95 = vector.multi_reduction <add>, %94, %cst_34 [1] : vector<8x8xf32> to vector<8xf32>
    %96 = vector.shape_cast %95 : vector<8xf32> to vector<8x1xf32>
    %97 = tpu.reciprocal %96 {approx = true} : vector<8x1xf32> -> vector<8x1xf32>
    %98 = vector.broadcast %97 : vector<8x1xf32> to vector<8x8xf32>
    %99 = arith.mulf %94, %98 : vector<8x8xf32>
    %cst_35 = arith.constant dense<0.000000e+00> : vector<8x8xf32>
    %100 = tpu.matmul %99, %87, %cst_35 {dimension_numbers = #tpu.dot_dimension_numbers<[1], [0], [0], [1], [0, 0, 1, 1], [], []>} : vector<8x8xf32>, vector<8x8xf32>, vector<8x8xf32> -> vector<8x8xf32>
    %c24 = arith.constant 24 : index
    %c0_36 = arith.constant 0 : index
    %101 = vector.load %arg5[%c24, %c0_36] : memref<32x32xf32, #tpu.memory_space<vmem>>, vector<8x32xf32>
    %cst_37 = arith.constant dense<0.000000e+00> : vector<8x32xf32>
    %102 = tpu.matmul %100, %101, %cst_37 {dimension_numbers = #tpu.dot_dimension_numbers<[1], [0], [0], [1], [0, 0, 1, 1], [], []>} : vector<8x8xf32>, vector<8x32xf32>, vector<8x32xf32> -> vector<8x32xf32>
    %103 = arith.addf %84, %102 : vector<8x32xf32>
    %104 = vector.broadcast %2 : vector<1x32xf32> to vector<8x32xf32>
    %105 = arith.addf %103, %104 : vector<8x32xf32>
    %106 = arith.addf %12, %105 : vector<8x32xf32>
    %cst_38 = arith.constant dense<0.000000e+00> : vector<8xf32>
    %107 = vector.multi_reduction <add>, %106, %cst_38 [1] : vector<8x32xf32> to vector<8xf32>
    %108 = vector.shape_cast %107 : vector<8xf32> to vector<8x1xf32>
    %cst_39 = arith.constant 3.200000e+01 : f32
    %109 = vector.broadcast %cst_39 : f32 to vector<8x1xf32>
    %110 = arith.divf %108, %109 : vector<8x1xf32>
    %111 = vector.broadcast %110 : vector<8x1xf32> to vector<8x32xf32>
    %112 = arith.subf %106, %111 : vector<8x32xf32>
    %113 = arith.mulf %112, %112 : vector<8x32xf32>
    %cst_40 = arith.constant dense<0.000000e+00> : vector<8xf32>
    %114 = vector.multi_reduction <add>, %113, %cst_40 [1] : vector<8x32xf32> to vector<8xf32>
    %115 = vector.shape_cast %114 : vector<8xf32> to vector<8x1xf32>
    %cst_41 = arith.constant 3.200000e+01 : f32
    %116 = vector.broadcast %cst_41 : f32 to vector<8x1xf32>
    %117 = arith.divf %115, %116 : vector<8x1xf32>
    %cst_42 = arith.constant 9.99999974E-6 : f32
    %118 = vector.broadcast %cst_42 : f32 to vector<8x1xf32>
    %119 = arith.addf %117, %118 : vector<8x1xf32>
    %120 = math.rsqrt %119 : vector<8x1xf32>
    %121 = vector.broadcast %120 : vector<8x1xf32> to vector<8x32xf32>
    %122 = arith.mulf %112, %121 : vector<8x32xf32>
    %123 = vector.broadcast %5 : vector<1x32xf32> to vector<8x32xf32>
    %124 = arith.mulf %122, %123 : vector<8x32xf32>
    %125 = vector.broadcast %6 : vector<1x32xf32> to vector<8x32xf32>
    %126 = arith.addf %124, %125 : vector<8x32xf32>
    %c0_43 = arith.constant 0 : index
    %c0_44 = arith.constant 0 : index
    %127 = vector.load %arg6[%c0_43, %c0_44] : memref<32x32xf32, #tpu.memory_space<vmem>>, vector<32x32xf32>
    %cst_45 = arith.constant dense<0.000000e+00> : vector<8x32xf32>
    %128 = tpu.matmul %126, %127, %cst_45 {dimension_numbers = #tpu.dot_dimension_numbers<[1], [0], [0], [1], [0, 0, 1, 1], [], []>} : vector<8x32xf32>, vector<32x32xf32>, vector<8x32xf32> -> vector<8x32xf32>
    %129 = vector.broadcast %1 : vector<1x32xf32> to vector<8x32xf32>
    %130 = arith.addf %128, %129 : vector<8x32xf32>
    %c0_46 = arith.constant 0 : index
    %c0_47 = arith.constant 0 : index
    %131 = vector.load %arg7[%c0_46, %c0_47] : memref<32x64xf32, #tpu.memory_space<vmem>>, vector<32x64xf32>
    %cst_48 = arith.constant dense<0.000000e+00> : vector<16x64xf32>
    %132 = tpu.matmul %14, %131, %cst_48 {dimension_numbers = #tpu.dot_dimension_numbers<[1], [0], [0], [1], [0, 0, 1, 1], [], []>} : vector<16x32xf32>, vector<32x64xf32>, vector<16x64xf32> -> vector<16x64xf32>
    %c0_49 = arith.constant 0 : index
    %c0_50 = arith.constant 0 : index
    %133 = vector.load %arg8[%c0_49, %c0_50] : memref<1x64xf32, #tpu.memory_space<vmem>>, vector<1x64xf32>
    %134 = vector.broadcast %133 : vector<1x64xf32> to vector<16x64xf32>
    %135 = arith.addf %132, %134 : vector<16x64xf32>
    %136 = vector.extract_strided_slice %135 {offsets = [0, 0], sizes = [16, 32], strides = [1, 1]} : vector<16x64xf32> to vector<16x32xf32>
    %137 = vector.extract_strided_slice %135 {offsets = [0, 32], sizes = [16, 32], strides = [1, 1]} : vector<16x64xf32> to vector<16x32xf32>
    %138 = vector.extract_strided_slice %130 {offsets = [0, 0], sizes = [8, 8], strides = [1, 1]} : vector<8x32xf32> to vector<8x8xf32>
    %139 = vector.extract_strided_slice %136 {offsets = [0, 0], sizes = [16, 8], strides = [1, 1]} : vector<16x32xf32> to vector<16x8xf32>
    %140 = vector.extract_strided_slice %137 {offsets = [0, 0], sizes = [16, 8], strides = [1, 1]} : vector<16x32xf32> to vector<16x8xf32>
    %cst_51 = arith.constant dense<0.000000e+00> : vector<8x16xf32>
    %141 = tpu.matmul %138, %139, %cst_51 {dimension_numbers = #tpu.dot_dimension_numbers<[1], [1], [0], [0], [0, 0, 1, 0], [], []>} : vector<8x8xf32>, vector<16x8xf32>, vector<8x16xf32> -> vector<8x16xf32>
    %cst_52 = arith.constant dense<0xFF800000> : vector<8xf32>
    %142 = vector.multi_reduction <maximumf>, %141, %cst_52 [1] : vector<8x16xf32> to vector<8xf32>
    %143 = vector.shape_cast %142 : vector<8xf32> to vector<8x1xf32>
    %144 = vector.broadcast %143 : vector<8x1xf32> to vector<8x16xf32>
    %145 = arith.subf %141, %144 : vector<8x16xf32>
    %146 = math.exp %145 : vector<8x16xf32>
    %cst_53 = arith.constant dense<0.000000e+00> : vector<8xf32>
    %147 = vector.multi_reduction <add>, %146, %cst_53 [1] : vector<8x16xf32> to vector<8xf32>
    %148 = vector.shape_cast %147 : vector<8xf32> to vector<8x1xf32>
    %149 = tpu.reciprocal %148 {approx = true} : vector<8x1xf32> -> vector<8x1xf32>
    %150 = vector.broadcast %149 : vector<8x1xf32> to vector<8x16xf32>
    %151 = arith.mulf %146, %150 : vector<8x16xf32>
    %cst_54 = arith.constant dense<0.000000e+00> : vector<8x8xf32>
    %152 = tpu.matmul %151, %140, %cst_54 {dimension_numbers = #tpu.dot_dimension_numbers<[1], [0], [0], [1], [0, 0, 1, 1], [], []>} : vector<8x16xf32>, vector<16x8xf32>, vector<8x8xf32> -> vector<8x8xf32>
    %c0_55 = arith.constant 0 : index
    %c0_56 = arith.constant 0 : index
    %153 = vector.load %arg9[%c0_55, %c0_56] : memref<32x32xf32, #tpu.memory_space<vmem>>, vector<8x32xf32>
    %cst_57 = arith.constant dense<0.000000e+00> : vector<8x32xf32>
    %154 = tpu.matmul %152, %153, %cst_57 {dimension_numbers = #tpu.dot_dimension_numbers<[1], [0], [0], [1], [0, 0, 1, 1], [], []>} : vector<8x8xf32>, vector<8x32xf32>, vector<8x32xf32> -> vector<8x32xf32>
    %155 = vector.extract_strided_slice %130 {offsets = [0, 8], sizes = [8, 8], strides = [1, 1]} : vector<8x32xf32> to vector<8x8xf32>
    %156 = vector.extract_strided_slice %136 {offsets = [0, 8], sizes = [16, 8], strides = [1, 1]} : vector<16x32xf32> to vector<16x8xf32>
    %157 = vector.extract_strided_slice %137 {offsets = [0, 8], sizes = [16, 8], strides = [1, 1]} : vector<16x32xf32> to vector<16x8xf32>
    %cst_58 = arith.constant dense<0.000000e+00> : vector<8x16xf32>
    %158 = tpu.matmul %155, %156, %cst_58 {dimension_numbers = #tpu.dot_dimension_numbers<[1], [1], [0], [0], [0, 0, 1, 0], [], []>} : vector<8x8xf32>, vector<16x8xf32>, vector<8x16xf32> -> vector<8x16xf32>
    %cst_59 = arith.constant dense<0xFF800000> : vector<8xf32>
    %159 = vector.multi_reduction <maximumf>, %158, %cst_59 [1] : vector<8x16xf32> to vector<8xf32>
    %160 = vector.shape_cast %159 : vector<8xf32> to vector<8x1xf32>
    %161 = vector.broadcast %160 : vector<8x1xf32> to vector<8x16xf32>
    %162 = arith.subf %158, %161 : vector<8x16xf32>
    %163 = math.exp %162 : vector<8x16xf32>
    %cst_60 = arith.constant dense<0.000000e+00> : vector<8xf32>
    %164 = vector.multi_reduction <add>, %163, %cst_60 [1] : vector<8x16xf32> to vector<8xf32>
    %165 = vector.shape_cast %164 : vector<8xf32> to vector<8x1xf32>
    %166 = tpu.reciprocal %165 {approx = true} : vector<8x1xf32> -> vector<8x1xf32>
    %167 = vector.broadcast %166 : vector<8x1xf32> to vector<8x16xf32>
    %168 = arith.mulf %163, %167 : vector<8x16xf32>
    %cst_61 = arith.constant dense<0.000000e+00> : vector<8x8xf32>
    %169 = tpu.matmul %168, %157, %cst_61 {dimension_numbers = #tpu.dot_dimension_numbers<[1], [0], [0], [1], [0, 0, 1, 1], [], []>} : vector<8x16xf32>, vector<16x8xf32>, vector<8x8xf32> -> vector<8x8xf32>
    %c8_62 = arith.constant 8 : index
    %c0_63 = arith.constant 0 : index
    %170 = vector.load %arg9[%c8_62, %c0_63] : memref<32x32xf32, #tpu.memory_space<vmem>>, vector<8x32xf32>
    %cst_64 = arith.constant dense<0.000000e+00> : vector<8x32xf32>
    %171 = tpu.matmul %169, %170, %cst_64 {dimension_numbers = #tpu.dot_dimension_numbers<[1], [0], [0], [1], [0, 0, 1, 1], [], []>} : vector<8x8xf32>, vector<8x32xf32>, vector<8x32xf32> -> vector<8x32xf32>
    %172 = arith.addf %154, %171 : vector<8x32xf32>
    %173 = vector.extract_strided_slice %130 {offsets = [0, 16], sizes = [8, 8], strides = [1, 1]} : vector<8x32xf32> to vector<8x8xf32>
    %174 = vector.extract_strided_slice %136 {offsets = [0, 16], sizes = [16, 8], strides = [1, 1]} : vector<16x32xf32> to vector<16x8xf32>
    %175 = vector.extract_strided_slice %137 {offsets = [0, 16], sizes = [16, 8], strides = [1, 1]} : vector<16x32xf32> to vector<16x8xf32>
    %cst_65 = arith.constant dense<0.000000e+00> : vector<8x16xf32>
    %176 = tpu.matmul %173, %174, %cst_65 {dimension_numbers = #tpu.dot_dimension_numbers<[1], [1], [0], [0], [0, 0, 1, 0], [], []>} : vector<8x8xf32>, vector<16x8xf32>, vector<8x16xf32> -> vector<8x16xf32>
    %cst_66 = arith.constant dense<0xFF800000> : vector<8xf32>
    %177 = vector.multi_reduction <maximumf>, %176, %cst_66 [1] : vector<8x16xf32> to vector<8xf32>
    %178 = vector.shape_cast %177 : vector<8xf32> to vector<8x1xf32>
    %179 = vector.broadcast %178 : vector<8x1xf32> to vector<8x16xf32>
    %180 = arith.subf %176, %179 : vector<8x16xf32>
    %181 = math.exp %180 : vector<8x16xf32>
    %cst_67 = arith.constant dense<0.000000e+00> : vector<8xf32>
    %182 = vector.multi_reduction <add>, %181, %cst_67 [1] : vector<8x16xf32> to vector<8xf32>
    %183 = vector.shape_cast %182 : vector<8xf32> to vector<8x1xf32>
    %184 = tpu.reciprocal %183 {approx = true} : vector<8x1xf32> -> vector<8x1xf32>
    %185 = vector.broadcast %184 : vector<8x1xf32> to vector<8x16xf32>
    %186 = arith.mulf %181, %185 : vector<8x16xf32>
    %cst_68 = arith.constant dense<0.000000e+00> : vector<8x8xf32>
    %187 = tpu.matmul %186, %175, %cst_68 {dimension_numbers = #tpu.dot_dimension_numbers<[1], [0], [0], [1], [0, 0, 1, 1], [], []>} : vector<8x16xf32>, vector<16x8xf32>, vector<8x8xf32> -> vector<8x8xf32>
    %c16_69 = arith.constant 16 : index
    %c0_70 = arith.constant 0 : index
    %188 = vector.load %arg9[%c16_69, %c0_70] : memref<32x32xf32, #tpu.memory_space<vmem>>, vector<8x32xf32>
    %cst_71 = arith.constant dense<0.000000e+00> : vector<8x32xf32>
    %189 = tpu.matmul %187, %188, %cst_71 {dimension_numbers = #tpu.dot_dimension_numbers<[1], [0], [0], [1], [0, 0, 1, 1], [], []>} : vector<8x8xf32>, vector<8x32xf32>, vector<8x32xf32> -> vector<8x32xf32>
    %190 = arith.addf %172, %189 : vector<8x32xf32>
    %191 = vector.extract_strided_slice %130 {offsets = [0, 24], sizes = [8, 8], strides = [1, 1]} : vector<8x32xf32> to vector<8x8xf32>
    %192 = vector.extract_strided_slice %136 {offsets = [0, 24], sizes = [16, 8], strides = [1, 1]} : vector<16x32xf32> to vector<16x8xf32>
    %193 = vector.extract_strided_slice %137 {offsets = [0, 24], sizes = [16, 8], strides = [1, 1]} : vector<16x32xf32> to vector<16x8xf32>
    %cst_72 = arith.constant dense<0.000000e+00> : vector<8x16xf32>
    %194 = tpu.matmul %191, %192, %cst_72 {dimension_numbers = #tpu.dot_dimension_numbers<[1], [1], [0], [0], [0, 0, 1, 0], [], []>} : vector<8x8xf32>, vector<16x8xf32>, vector<8x16xf32> -> vector<8x16xf32>
    %cst_73 = arith.constant dense<0xFF800000> : vector<8xf32>
    %195 = vector.multi_reduction <maximumf>, %194, %cst_73 [1] : vector<8x16xf32> to vector<8xf32>
    %196 = vector.shape_cast %195 : vector<8xf32> to vector<8x1xf32>
    %197 = vector.broadcast %196 : vector<8x1xf32> to vector<8x16xf32>
    %198 = arith.subf %194, %197 : vector<8x16xf32>
    %199 = math.exp %198 : vector<8x16xf32>
    %cst_74 = arith.constant dense<0.000000e+00> : vector<8xf32>
    %200 = vector.multi_reduction <add>, %199, %cst_74 [1] : vector<8x16xf32> to vector<8xf32>
    %201 = vector.shape_cast %200 : vector<8xf32> to vector<8x1xf32>
    %202 = tpu.reciprocal %201 {approx = true} : vector<8x1xf32> -> vector<8x1xf32>
    %203 = vector.broadcast %202 : vector<8x1xf32> to vector<8x16xf32>
    %204 = arith.mulf %199, %203 : vector<8x16xf32>
    %cst_75 = arith.constant dense<0.000000e+00> : vector<8x8xf32>
    %205 = tpu.matmul %204, %193, %cst_75 {dimension_numbers = #tpu.dot_dimension_numbers<[1], [0], [0], [1], [0, 0, 1, 1], [], []>} : vector<8x16xf32>, vector<16x8xf32>, vector<8x8xf32> -> vector<8x8xf32>
    %c24_76 = arith.constant 24 : index
    %c0_77 = arith.constant 0 : index
    %206 = vector.load %arg9[%c24_76, %c0_77] : memref<32x32xf32, #tpu.memory_space<vmem>>, vector<8x32xf32>
    %cst_78 = arith.constant dense<0.000000e+00> : vector<8x32xf32>
    %207 = tpu.matmul %205, %206, %cst_78 {dimension_numbers = #tpu.dot_dimension_numbers<[1], [0], [0], [1], [0, 0, 1, 1], [], []>} : vector<8x8xf32>, vector<8x32xf32>, vector<8x32xf32> -> vector<8x32xf32>
    %208 = arith.addf %190, %207 : vector<8x32xf32>
    %209 = vector.broadcast %3 : vector<1x32xf32> to vector<8x32xf32>
    %210 = arith.addf %208, %209 : vector<8x32xf32>
    %211 = arith.addf %126, %210 : vector<8x32xf32>
    %cst_79 = arith.constant dense<0.000000e+00> : vector<8xf32>
    %212 = vector.multi_reduction <add>, %211, %cst_79 [1] : vector<8x32xf32> to vector<8xf32>
    %213 = vector.shape_cast %212 : vector<8xf32> to vector<8x1xf32>
    %cst_80 = arith.constant 3.200000e+01 : f32
    %214 = vector.broadcast %cst_80 : f32 to vector<8x1xf32>
    %215 = arith.divf %213, %214 : vector<8x1xf32>
    %216 = vector.broadcast %215 : vector<8x1xf32> to vector<8x32xf32>
    %217 = arith.subf %211, %216 : vector<8x32xf32>
    %218 = arith.mulf %217, %217 : vector<8x32xf32>
    %cst_81 = arith.constant dense<0.000000e+00> : vector<8xf32>
    %219 = vector.multi_reduction <add>, %218, %cst_81 [1] : vector<8x32xf32> to vector<8xf32>
    %220 = vector.shape_cast %219 : vector<8xf32> to vector<8x1xf32>
    %cst_82 = arith.constant 3.200000e+01 : f32
    %221 = vector.broadcast %cst_82 : f32 to vector<8x1xf32>
    %222 = arith.divf %220, %221 : vector<8x1xf32>
    %cst_83 = arith.constant 9.99999974E-6 : f32
    %223 = vector.broadcast %cst_83 : f32 to vector<8x1xf32>
    %224 = arith.addf %222, %223 : vector<8x1xf32>
    %225 = math.rsqrt %224 : vector<8x1xf32>
    %226 = vector.broadcast %225 : vector<8x1xf32> to vector<8x32xf32>
    %227 = arith.mulf %217, %226 : vector<8x32xf32>
    %228 = vector.broadcast %7 : vector<1x32xf32> to vector<8x32xf32>
    %229 = arith.mulf %227, %228 : vector<8x32xf32>
    %230 = vector.broadcast %8 : vector<1x32xf32> to vector<8x32xf32>
    %231 = arith.addf %229, %230 : vector<8x32xf32>
    %c0_84 = arith.constant 0 : index
    %c0_85 = arith.constant 0 : index
    %232 = vector.load %arg10[%c0_84, %c0_85] : memref<32x64xf32, #tpu.memory_space<vmem>>, vector<32x64xf32>
    %cst_86 = arith.constant dense<0.000000e+00> : vector<8x64xf32>
    %233 = tpu.matmul %231, %232, %cst_86 {dimension_numbers = #tpu.dot_dimension_numbers<[1], [0], [0], [1], [0, 0, 1, 1], [], []>} : vector<8x32xf32>, vector<32x64xf32>, vector<8x64xf32> -> vector<8x64xf32>
    %c0_87 = arith.constant 0 : index
    %c0_88 = arith.constant 0 : index
    %234 = vector.load %arg11[%c0_87, %c0_88] : memref<1x64xf32, #tpu.memory_space<vmem>>, vector<1x64xf32>
    %235 = vector.broadcast %234 : vector<1x64xf32> to vector<8x64xf32>
    %236 = arith.addf %233, %235 : vector<8x64xf32>
    %cst_89 = arith.constant 0.000000e+00 : f32
    %237 = vector.broadcast %cst_89 : f32 to vector<8x64xf32>
    %238 = arith.maximumf %236, %237 : vector<8x64xf32>
    %c0_90 = arith.constant 0 : index
    %c0_91 = arith.constant 0 : index
    %239 = vector.load %arg12[%c0_90, %c0_91] : memref<64x32xf32, #tpu.memory_space<vmem>>, vector<64x32xf32>
    %cst_92 = arith.constant dense<0.000000e+00> : vector<8x32xf32>
    %240 = tpu.matmul %238, %239, %cst_92 {dimension_numbers = #tpu.dot_dimension_numbers<[1], [0], [0], [1], [0, 0, 1, 1], [], []>} : vector<8x64xf32>, vector<64x32xf32>, vector<8x32xf32> -> vector<8x32xf32>
    %241 = vector.broadcast %4 : vector<1x32xf32> to vector<8x32xf32>
    %242 = arith.addf %240, %241 : vector<8x32xf32>
    %243 = arith.addf %231, %242 : vector<8x32xf32>
    %cst_93 = arith.constant dense<0.000000e+00> : vector<8xf32>
    %244 = vector.multi_reduction <add>, %243, %cst_93 [1] : vector<8x32xf32> to vector<8xf32>
    %245 = vector.shape_cast %244 : vector<8xf32> to vector<8x1xf32>
    %cst_94 = arith.constant 3.200000e+01 : f32
    %246 = vector.broadcast %cst_94 : f32 to vector<8x1xf32>
    %247 = arith.divf %245, %246 : vector<8x1xf32>
    %248 = vector.broadcast %247 : vector<8x1xf32> to vector<8x32xf32>
    %249 = arith.subf %243, %248 : vector<8x32xf32>
    %250 = arith.mulf %249, %249 : vector<8x32xf32>
    %cst_95 = arith.constant dense<0.000000e+00> : vector<8xf32>
    %251 = vector.multi_reduction <add>, %250, %cst_95 [1] : vector<8x32xf32> to vector<8xf32>
    %252 = vector.shape_cast %251 : vector<8xf32> to vector<8x1xf32>
    %cst_96 = arith.constant 3.200000e+01 : f32
    %253 = vector.broadcast %cst_96 : f32 to vector<8x1xf32>
    %254 = arith.divf %252, %253 : vector<8x1xf32>
    %cst_97 = arith.constant 9.99999974E-6 : f32
    %255 = vector.broadcast %cst_97 : f32 to vector<8x1xf32>
    %256 = arith.addf %254, %255 : vector<8x1xf32>
    %257 = math.rsqrt %256 : vector<8x1xf32>
    %258 = vector.broadcast %257 : vector<8x1xf32> to vector<8x32xf32>
    %259 = arith.mulf %249, %258 : vector<8x32xf32>
    %260 = vector.broadcast %9 : vector<1x32xf32> to vector<8x32xf32>
    %261 = arith.mulf %259, %260 : vector<8x32xf32>
    %262 = vector.broadcast %10 : vector<1x32xf32> to vector<8x32xf32>
    %263 = arith.addf %261, %262 : vector<8x32xf32>
    %c0_98 = arith.constant 0 : index
    %c0_99 = arith.constant 0 : index
    %c0_100 = arith.constant 0 : index
    %264 = vector.load %arg14[%c0_98, %c0_99, %c0_100] : memref<1x8x32xf32, #tpu.memory_space<vmem>>, vector<1x8x32xf32>
    %265 = vector.shape_cast %264 : vector<1x8x32xf32> to vector<8x32xf32>
    %266 = vector.shape_cast %263 : vector<8x32xf32> to vector<1x8x32xf32>
    tpu.vector_store %arg14[%c0_98, %c0_99, %c0_100], %266 {strides = array<i32>} : memref<1x8x32xf32, #tpu.memory_space<vmem>>, vector<1x8x32xf32>,
    return
  }
  func.func @transform_0(%arg0: i32) -> (i32, i32, i32) {
    %c0_i32 = arith.constant 0 : i32
    %c0_i32_0 = arith.constant 0 : i32
    %c0_i32_1 = arith.constant 0 : i32
    return %arg0, %c0_i32, %c0_i32_0 : i32, i32, i32
  }
  func.func @transform_1(%arg0: i32) -> (i32, i32, i32) {
    %c0_i32 = arith.constant 0 : i32
    %c0_i32_0 = arith.constant 0 : i32
    %c0_i32_1 = arith.constant 0 : i32
    return %arg0, %c0_i32, %c0_i32_0 : i32, i32, i32
  }
  func.func @transform_2(%arg0: i32) -> (i32, i32) {
    %c0_i32 = arith.constant 0 : i32
    %c0_i32_0 = arith.constant 0 : i32
    %c0_i32_1 = arith.constant 0 : i32
    return %c0_i32, %c0_i32_0 : i32, i32
  }
  func.func @transform_3(%arg0: i32) -> (i32, i32) {
    %c0_i32 = arith.constant 0 : i32
    %c0_i32_0 = arith.constant 0 : i32
    %c0_i32_1 = arith.constant 0 : i32
    return %c0_i32, %c0_i32_0 : i32, i32
  }
  func.func @transform_4(%arg0: i32) -> (i32, i32) {
    %c0_i32 = arith.constant 0 : i32
    %c0_i32_0 = arith.constant 0 : i32
    %c0_i32_1 = arith.constant 0 : i32
    return %c0_i32, %c0_i32_0 : i32, i32
  }
  func.func @transform_5(%arg0: i32) -> (i32, i32) {
    %c0_i32 = arith.constant 0 : i32
    %c0_i32_0 = arith.constant 0 : i32
    %c0_i32_1 = arith.constant 0 : i32
    return %c0_i32, %c0_i32_0 : i32, i32
  }
  func.func @transform_6(%arg0: i32) -> (i32, i32) {
    %c0_i32 = arith.constant 0 : i32
    %c0_i32_0 = arith.constant 0 : i32
    %c0_i32_1 = arith.constant 0 : i32
    return %c0_i32, %c0_i32_0 : i32, i32
  }
  func.func @transform_7(%arg0: i32) -> (i32, i32) {
    %c0_i32 = arith.constant 0 : i32
    %c0_i32_0 = arith.constant 0 : i32
    %c0_i32_1 = arith.constant 0 : i32
    return %c0_i32, %c0_i32_0 : i32, i32
  }
  func.func @transform_8(%arg0: i32) -> (i32, i32) {
    %c0_i32 = arith.constant 0 : i32
    %c0_i32_0 = arith.constant 0 : i32
    %c0_i32_1 = arith.constant 0 : i32
    return %c0_i32, %c0_i32_0 : i32, i32
  }
  func.func @transform_9(%arg0: i32) -> (i32, i32) {
    %c0_i32 = arith.constant 0 : i32
    %c0_i32_0 = arith.constant 0 : i32
    %c0_i32_1 = arith.constant 0 : i32
    return %c0_i32, %c0_i32_0 : i32, i32
  }
  func.func @transform_10(%arg0: i32) -> (i32, i32) {
    %c0_i32 = arith.constant 0 : i32
    %c0_i32_0 = arith.constant 0 : i32
    %c0_i32_1 = arith.constant 0 : i32
    return %c0_i32, %c0_i32_0 : i32, i32
  }
  func.func @transform_11(%arg0: i32) -> (i32, i32) {
    %c0_i32 = arith.constant 0 : i32
    %c0_i32_0 = arith.constant 0 : i32
    %c0_i32_1 = arith.constant 0 : i32
    return %c0_i32, %c0_i32_0 : i32, i32
  }
  func.func @transform_12(%arg0: i32) -> (i32, i32) {
    %c0_i32 = arith.constant 0 : i32
    %c0_i32_0 = arith.constant 0 : i32
    %c0_i32_1 = arith.constant 0 : i32
    return %c0_i32, %c0_i32_0 : i32, i32
  }
  func.func @transform_13(%arg0: i32) -> (i32, i32, i32) {
    %c0_i32 = arith.constant 0 : i32
    %c0_i32_0 = arith.constant 0 : i32
    %c0_i32_1 = arith.constant 0 : i32
    return %arg0, %c0_i32, %c0_i32_0 : i32, i32, i32
  }
}

</mosaic_0001>

<llo_original>
// kernel: tpu_custom_call.1
$region0: #{tpu_custom_call.1}
  #allocation0 [shape = 'u32[]', space=smem, size = 0x4, offset = 0x4, fixed_abs, tag = 'smem constant byte address 0x4 - core index']
  #allocation1 [shape = 'u32[72,128]{1,0:T(1,128)}', space=vmem, size = 0x9000, scoped, tag = 'internal scratch']
  %s0 = inlined_call_operand.hbm [shape: f32[2,8,32], index: 0, kind: input, shape index: {}]
  %s1 = inlined_call_operand.vmem [shape: f32[2,16,32], index: 1, kind: input, shape index: {}]
  %s2 = inlined_call_operand.vmem [shape: f32[32,96], index: 2, kind: input, shape index: {}]
  %s3 = inlined_call_operand.vmem [shape: f32[1,96], index: 3, kind: input, shape index: {}]
  %s4 = inlined_call_operand.vmem [shape: f32[32,32], index: 4, kind: input, shape index: {}]
  %s5 = inlined_call_operand.hbm [shape: f32[32,32], index: 5, kind: input, shape index: {}]
  %s6 = inlined_call_operand.hbm [shape: f32[32,64], index: 6, kind: input, shape index: {}]
  %s7 = inlined_call_operand.vmem [shape: f32[1,64], index: 7, kind: input, shape index: {}]
  %s8 = inlined_call_operand.hbm [shape: f32[32,32], index: 8, kind: input, shape index: {}]
  %s9 = inlined_call_operand.hbm [shape: f32[32,64], index: 9, kind: input, shape index: {}]
  %s10 = inlined_call_operand.vmem [shape: f32[1,64], index: 10, kind: input, shape index: {}]
  %s11 = inlined_call_operand.vmem [shape: f32[64,32], index: 11, kind: input, shape index: {}]
  %s12 = inlined_call_operand.hbm [shape: f32[10,32], index: 12, kind: input, shape index: {}]
  %s13 = inlined_call_operand.hbm [shape: f32[2,8,32], index: 13, kind: output, shape index: {}]
  %s14 = sld [smem:[#allocation0]]
  $region109: #{tpu_custom_call.1} parent=0
    _
  %s16 = ssub.s32 1, %s14
  %s17 = scalar_select 0, %s16, %s14
  $region1: #{tpu_custom_call.1} parent=0
    #allocation2 [shape = 'u8[8192]{0}', space=vmem, size = 0x2000, scoped, tag = 'input window, operand 0']
    #allocation3 [shape = 's32[2]{0}', space=sflag, size = 0x8, scoped, tag = 'scoped memory for tpu_custom_call.1']
    #allocation4 [shape = 's32[2]{0}', space=sflag, size = 0x8, scoped, tag = 'scoped memory for tpu_custom_call.1']
    #allocation5 [shape = 'u8[16384]{0}', space=vmem, size = 0x4000, scoped, tag = 'input window, operand 5, single buffered']
    #allocation6 [shape = 's32[1]{0}', space=sflag, size = 0x4, scoped, tag = 'scoped memory for tpu_custom_call.1']
    #allocation7 [shape = 'u8[16384]{0}', space=vmem, size = 0x4000, scoped, tag = 'input window, operand 6, single buffered']
    #allocation8 [shape = 'u8[16384]{0}', space=vmem, size = 0x4000, scoped, tag = 'input window, operand 8, single buffered']
    #allocation9 [shape = 's32[1]{0}', space=sflag, size = 0x4, scoped, tag = 'scoped memory for tpu_custom_call.1']
    #allocation10 [shape = 'u8[16384]{0}', space=vmem, size = 0x4000, scoped, tag = 'input window, operand 9, single buffered']
    #allocation11 [shape = 'u8[8192]{0}', space=vmem, size = 0x2000, scoped, tag = 'input window, operand 12, single buffered']
    #allocation12 [shape = 's32[1]{0}', space=sflag, size = 0x4, scoped, tag = 'scoped memory for tpu_custom_call.1']
    #allocation13 [shape = 'u8[8192]{0}', space=vmem, size = 0x2000, scoped, tag = 'output window, operand 0']
    %18 = vsyncpa [#allocation3], 0
    %s19 = scalar_lea.sflag [#allocation3], 1
    %20 = vsyncpa %s19, 0
    %21 = vsyncpa [#allocation6], 0
    %22 = vsyncpa [#allocation9], 0
    %23 = vsyncpa [#allocation12], 0
    %24 = vsyncpa [#allocation4], 0
    %s25 = scalar_lea.sflag [#allocation4], 1
    %26 = vsyncpa %s25, 0
    loop: start=0, step=1, limit=4
    $region2: #{tpu_custom_call.1} parent=1 // loop_pre_header
      _
    $region3: #{tpu_custom_call.1} parent=1 // loop_header
      %s28 = sphi 0, %s32
      %p29 = scmp.ge.s32.totalorder %s28, 4
      %s38 = sphi 0, %s40
      %s41 = sphi 0, %s38
      %s42 = sphi 0, %s41
      %s58 = sphi 0, %s42
      %s64 = sphi 0, %s66
      %s67 = sphi 0, %s64
      %s68 = sphi 0, %s67
      %s84 = sphi 0, %s68
      %s88 = sphi 0, %s88
      %s90 = sphi 0, %s88
      %s91 = sphi 0, %s90
      %s105 = sphi 0, %s91
      %s109 = sphi 0, %s109
      %s111 = sphi 0, %s109
      %s112 = sphi 0, %s111
      %s126 = sphi 0, %s112
      %s130 = sphi 0, %s130
      %s132 = sphi 0, %s130
      %s133 = sphi 0, %s132
      %s147 = sphi 0, %s133
      %s151 = sphi 0, %s151
      %s153 = sphi 0, %s151
      %s154 = sphi 0, %s153
      %s168 = sphi 0, %s154
      %s172 = sphi 0, %s172
      %s174 = sphi 0, %s172
      %s175 = sphi 0, %s174
      %s189 = sphi 0, %s175
      %s193 = sphi 0, %s193
      %s195 = sphi 0, %s193
      %s196 = sphi 0, %s195
      %s210 = sphi 0, %s196
      %s214 = sphi 0, %s214
      %s216 = sphi 0, %s214
      %s217 = sphi 0, %s216
      %s231 = sphi 0, %s217
      %s235 = sphi 0, %s235
      %s237 = sphi 0, %s235
      %s238 = sphi 0, %s237
      %s252 = sphi 0, %s238
      %s256 = sphi 0, %s256
      %s258 = sphi 0, %s256
      %s259 = sphi 0, %s258
      %s273 = sphi 0, %s259
      %s277 = sphi 0, %s277
      %s279 = sphi 0, %s277
      %s280 = sphi 0, %s279
      %s294 = sphi 0, %s280
      %s298 = sphi 0, %s298
      %s300 = sphi 0, %s298
      %s301 = sphi 0, %s300
      %s315 = sphi 0, %s301
      %s321 = sphi 0, %s323
      %s324 = sphi 0, %s321
      %s325 = sphi 0, %s324
      %s341 = sphi 0, %s325
    $region4: #{tpu_custom_call.1} parent=1 // loop_header_branch
      %31 = sbr.rel (%p29) target = $region8
    $region5: #{tpu_custom_call.1} parent=1 // loop_body
      %s33 = ssub.s32 %s28, 1
      %s34 = ssub.s32 %s28, 2
      %s35 = sadd.s32 %s28, 1
      %s36 = ssub.s32 %s28, %s35
      %p37 = scmp.eq.s32.totalorder %s36, 0
      %s39 = sadd.s32 %s38, 1
      %s40 = scalar_select %p37, %s38, %s39
      %p43 = pneg %p37
      %p44 = scmp.eq.s32.totalorder %s28, 1
      %p45 = por %p43, %p44
      %p46 = scmp.ne.s32.totalorder %s38, %s41
      %p47 = scmp.eq.s32.totalorder %s28, 0
      %p48 = por %p46, %p47
      %p49 = scmp.ne.s32.totalorder %s38, %s41
      %p50 = scmp.eq.s32.totalorder %s33, 1
      %p51 = por %p49, %p50
      %p52 = scmp.ne.s32.totalorder %s41, %s42
      %p53 = scmp.eq.s32.totalorder %s33, 0
      %p54 = por %p52, %p53
      %p55 = scmp.ne.s32.totalorder %s41, %s42
      %p56 = scmp.eq.s32.totalorder %s34, 1
      %p57 = por %p55, %p56
      %p59 = scmp.ne.s32.totalorder %s42, %s58
      %p60 = scmp.eq.s32.totalorder %s34, 0
      %p61 = por %p59, %p60
      %s62 = ssub.s32 %s28, %s35
      %p63 = scmp.eq.s32.totalorder %s62, 0
      %s65 = sadd.s32 %s64, 1
      %s66 = scalar_select %p63, %s64, %s65
      %p69 = pneg %p63
      %p70 = scmp.eq.s32.totalorder %s28, 1
      %p71 = por %p69, %p70
      %p72 = scmp.ne.s32.totalorder %s64, %s67
      %p73 = scmp.eq.s32.totalorder %s28, 0
      %p74 = por %p72, %p73
      %p75 = scmp.ne.s32.totalorder %s64, %s67
      %p76 = scmp.eq.s32.totalorder %s33, 1
      %p77 = por %p75, %p76
      %p78 = scmp.ne.s32.totalorder %s67, %s68
      %p79 = scmp.eq.s32.totalorder %s33, 0
      %p80 = por %p78, %p79
      %p81 = scmp.ne.s32.totalorder %s67, %s68
      %p82 = scmp.eq.s32.totalorder %s34, 1
      %p83 = por %p81, %p82
      %p85 = scmp.ne.s32.totalorder %s68, %s84
      %p86 = scmp.eq.s32.totalorder %s34, 0
      %p87 = por %p85, %p86
      %s89 = sadd.s32 %s88, 1
      %p92 = scmp.eq.s32.totalorder %s28, 1
      %p93 = scmp.ne.s32.totalorder %s88, %s90
      %p94 = scmp.eq.s32.totalorder %s28, 0
      %p95 = por %p93, %p94
      %p96 = scmp.ne.s32.totalorder %s88, %s90
      %p97 = scmp.eq.s32.totalorder %s33, 1
      %p98 = por %p96, %p97
      %p99 = scmp.ne.s32.totalorder %s90, %s91
      %p100 = scmp.eq.s32.totalorder %s33, 0
      %p101 = por %p99, %p100
      %p102 = scmp.ne.s32.totalorder %s90, %s91
      %p103 = scmp.eq.s32.totalorder %s34, 1
      %p104 = por %p102, %p103
      %p106 = scmp.ne.s32.totalorder %s91, %s105
      %p107 = scmp.eq.s32.totalorder %s34, 0
      %p108 = por %p106, %p107
      %s110 = sadd.s32 %s109, 1
      %p113 = scmp.eq.s32.totalorder %s28, 1
      %p114 = scmp.ne.s32.totalorder %s109, %s111
      %p115 = scmp.eq.s32.totalorder %s28, 0
      %p116 = por %p114, %p115
      %p117 = scmp.ne.s32.totalorder %s109, %s111
      %p118 = scmp.eq.s32.totalorder %s33, 1
      %p119 = por %p117, %p118
      %p120 = scmp.ne.s32.totalorder %s111, %s112
      %p121 = scmp.eq.s32.totalorder %s33, 0
      %p122 = por %p120, %p121
      %p123 = scmp.ne.s32.totalorder %s111, %s112
      %p124 = scmp.eq.s32.totalorder %s34, 1
      %p125 = por %p123, %p124
      %p127 = scmp.ne.s32.totalorder %s112, %s126
      %p128 = scmp.eq.s32.totalorder %s34, 0
      %p129 = por %p127, %p128
      %s131 = sadd.s32 %s130, 1
      %p134 = scmp.eq.s32.totalorder %s28, 1
      %p135 = scmp.ne.s32.totalorder %s130, %s132
      %p136 = scmp.eq.s32.totalorder %s28, 0
      %p137 = por %p135, %p136
      %p138 = scmp.ne.s32.totalorder %s130, %s132
      %p139 = scmp.eq.s32.totalorder %s33, 1
      %p140 = por %p138, %p139
      %p141 = scmp.ne.s32.totalorder %s132, %s133
      %p142 = scmp.eq.s32.totalorder %s33, 0
      %p143 = por %p141, %p142
      %p144 = scmp.ne.s32.totalorder %s132, %s133
      %p145 = scmp.eq.s32.totalorder %s34, 1
      %p146 = por %p144, %p145
      %p148 = scmp.ne.s32.totalorder %s133, %s147
      %p149 = scmp.eq.s32.totalorder %s34, 0
      %p150 = por %p148, %p149
      %s152 = sadd.s32 %s151, 1
      %p155 = scmp.eq.s32.totalorder %s28, 1
      %p156 = scmp.ne.s32.totalorder %s151, %s153
      %p157 = scmp.eq.s32.totalorder %s28, 0
      %p158 = por %p156, %p157
      %p159 = scmp.ne.s32.totalorder %s151, %s153
      %p160 = scmp.eq.s32.totalorder %s33, 1
      %p161 = por %p159, %p160
      %p162 = scmp.ne.s32.totalorder %s153, %s154
      %p163 = scmp.eq.s32.totalorder %s33, 0
      %p164 = por %p162, %p163
      %p165 = scmp.ne.s32.totalorder %s153, %s154
      %p166 = scmp.eq.s32.totalorder %s34, 1
      %p167 = por %p165, %p166
      %p169 = scmp.ne.s32.totalorder %s154, %s168
      %p170 = scmp.eq.s32.totalorder %s34, 0
      %p171 = por %p169, %p170
      %s173 = sadd.s32 %s172, 1
      %p176 = scmp.eq.s32.totalorder %s28, 1
      %p177 = scmp.ne.s32.totalorder %s172, %s174
      %p178 = scmp.eq.s32.totalorder %s28, 0
      %p179 = por %p177, %p178
      %p180 = scmp.ne.s32.totalorder %s172, %s174
      %p181 = scmp.eq.s32.totalorder %s33, 1
      %p182 = por %p180, %p181
      %p183 = scmp.ne.s32.totalorder %s174, %s175
      %p184 = scmp.eq.s32.totalorder %s33, 0
      %p185 = por %p183, %p184
      %p186 = scmp.ne.s32.totalorder %s174, %s175
      %p187 = scmp.eq.s32.totalorder %s34, 1
      %p188 = por %p186, %p187
      %p190 = scmp.ne.s32.totalorder %s175, %s189
      %p191 = scmp.eq.s32.totalorder %s34, 0
      %p192 = por %p190, %p191
      %s194 = sadd.s32 %s193, 1
      %p197 = scmp.eq.s32.totalorder %s28, 1
      %p198 = scmp.ne.s32.totalorder %s193, %s195
      %p199 = scmp.eq.s32.totalorder %s28, 0
      %p200 = por %p198, %p199
      %p201 = scmp.ne.s32.totalorder %s193, %s195
      %p202 = scmp.eq.s32.totalorder %s33, 1
      %p203 = por %p201, %p202
      %p204 = scmp.ne.s32.totalorder %s195, %s196
      %p205 = scmp.eq.s32.totalorder %s33, 0
      %p206 = por %p204, %p205
      %p207 = scmp.ne.s32.totalorder %s195, %s196
      %p208 = scmp.eq.s32.totalorder %s34, 1
      %p209 = por %p207, %p208
      %p211 = scmp.ne.s32.totalorder %s196, %s210
      %p212 = scmp.eq.s32.totalorder %s34, 0
      %p213 = por %p211, %p212
      %s215 = sadd.s32 %s214, 1
      %p218 = scmp.eq.s32.totalorder %s28, 1
      %p219 = scmp.ne.s32.totalorder %s214, %s216
      %p220 = scmp.eq.s32.totalorder %s28, 0
      %p221 = por %p219, %p220
      %p222 = scmp.ne.s32.totalorder %s214, %s216
      %p223 = scmp.eq.s32.totalorder %s33, 1
      %p224 = por %p222, %p223
      %p225 = scmp.ne.s32.totalorder %s216, %s217
      %p226 = scmp.eq.s32.totalorder %s33, 0
      %p227 = por %p225, %p226
      %p228 = scmp.ne.s32.totalorder %s216, %s217
      %p229 = scmp.eq.s32.totalorder %s34, 1
      %p230 = por %p228, %p229
      %p232 = scmp.ne.s32.totalorder %s217, %s231
      %p233 = scmp.eq.s32.totalorder %s34, 0
      %p234 = por %p232, %p233
      %s236 = sadd.s32 %s235, 1
      %p239 = scmp.eq.s32.totalorder %s28, 1
      %p240 = scmp.ne.s32.totalorder %s235, %s237
      %p241 = scmp.eq.s32.totalorder %s28, 0
      %p242 = por %p240, %p241
      %p243 = scmp.ne.s32.totalorder %s235, %s237
      %p244 = scmp.eq.s32.totalorder %s33, 1
      %p245 = por %p243, %p244
      %p246 = scmp.ne.s32.totalorder %s237, %s238
      %p247 = scmp.eq.s32.totalorder %s33, 0
      %p248 = por %p246, %p247
      %p249 = scmp.ne.s32.totalorder %s237, %s238
      %p250 = scmp.eq.s32.totalorder %s34, 1
      %p251 = por %p249, %p250
      %p253 = scmp.ne.s32.totalorder %s238, %s252
      %p254 = scmp.eq.s32.totalorder %s34, 0
      %p255 = por %p253, %p254
      %s257 = sadd.s32 %s256, 1
      %p260 = scmp.eq.s32.totalorder %s28, 1
      %p261 = scmp.ne.s32.totalorder %s256, %s258
      %p262 = scmp.eq.s32.totalorder %s28, 0
      %p263 = por %p261, %p262
      %p264 = scmp.ne.s32.totalorder %s256, %s258
      %p265 = scmp.eq.s32.totalorder %s33, 1
      %p266 = por %p264, %p265
      %p267 = scmp.ne.s32.totalorder %s258, %s259
      %p268 = scmp.eq.s32.totalorder %s33, 0
      %p269 = por %p267, %p268
      %p270 = scmp.ne.s32.totalorder %s258, %s259
      %p271 = scmp.eq.s32.totalorder %s34, 1
      %p272 = por %p270, %p271
      %p274 = scmp.ne.s32.totalorder %s259, %s273
      %p275 = scmp.eq.s32.totalorder %s34, 0
      %p276 = por %p274, %p275
      %s278 = sadd.s32 %s277, 1
      %p281 = scmp.eq.s32.totalorder %s28, 1
      %p282 = scmp.ne.s32.totalorder %s277, %s279
      %p283 = scmp.eq.s32.totalorder %s28, 0
      %p284 = por %p282, %p283
      %p285 = scmp.ne.s32.totalorder %s277, %s279
      %p286 = scmp.eq.s32.totalorder %s33, 1
      %p287 = por %p285, %p286
      %p288 = scmp.ne.s32.totalorder %s279, %s280
      %p289 = scmp.eq.s32.totalorder %s33, 0
      %p290 = por %p288, %p289
      %p291 = scmp.ne.s32.totalorder %s279, %s280
      %p292 = scmp.eq.s32.totalorder %s34, 1
      %p293 = por %p291, %p292
      %p295 = scmp.ne.s32.totalorder %s280, %s294
      %p296 = scmp.eq.s32.totalorder %s34, 0
      %p297 = por %p295, %p296
      %s299 = sadd.s32 %s298, 1
      %p302 = scmp.eq.s32.totalorder %s28, 1
      %p303 = scmp.ne.s32.totalorder %s298, %s300
      %p304 = scmp.eq.s32.totalorder %s28, 0
      %p305 = por %p303, %p304
      %p306 = scmp.ne.s32.totalorder %s298, %s300
      %p307 = scmp.eq.s32.totalorder %s33, 1
      %p308 = por %p306, %p307
      %p309 = scmp.ne.s32.totalorder %s300, %s301
      %p310 = scmp.eq.s32.totalorder %s33, 0
      %p311 = por %p309, %p310
      %p312 = scmp.ne.s32.totalorder %s300, %s301
      %p313 = scmp.eq.s32.totalorder %s34, 1
      %p314 = por %p312, %p313
      %p316 = scmp.ne.s32.totalorder %s301, %s315
      %p317 = scmp.eq.s32.totalorder %s34, 0
      %p318 = por %p316, %p317
      %s319 = ssub.s32 %s28, %s35
      %p320 = scmp.eq.s32.totalorder %s319, 0
      %s322 = sadd.s32 %s321, 1
      %s323 = scalar_select %p320, %s321, %s322
      %p326 = pneg %p320
      %p327 = scmp.eq.s32.totalorder %s28, 1
      %p328 = por %p326, %p327
      %p329 = scmp.ne.s32.totalorder %s321, %s324
      %p330 = scmp.eq.s32.totalorder %s28, 0
      %p331 = por %p329, %p330
      %p332 = scmp.ne.s32.totalorder %s321, %s324
      %p333 = scmp.eq.s32.totalorder %s33, 1
      %p334 = por %p332, %p333
      %p335 = scmp.ne.s32.totalorder %s324, %s325
      %p336 = scmp.eq.s32.totalorder %s33, 0
      %p337 = por %p335, %p336
      %p338 = scmp.ne.s32.totalorder %s324, %s325
      %p339 = scmp.eq.s32.totalorder %s34, 1
      %p340 = por %p338, %p339
      %p342 = scmp.ne.s32.totalorder %s325, %s341
      %p343 = scmp.eq.s32.totalorder %s34, 0
      %p344 = por %p342, %p343
      %p345 = scmp.le.s32.totalorder 1, %s28
      %p346 = scmp.lt.s32.totalorder %s28, 3
      %p347 = pnand %p345, %p346
      %p348 = pneg %p347
      // Predicated region
      $region9: #{tpu_custom_call.1} parent=5 // pred_check
        _
      $region10: #{tpu_custom_call.1} parent=5 // pred_check_branch
        %350 = sbr.rel (%p347) target = $region12
      $region11: #{tpu_custom_call.1} parent=5 // pred_region
        %s351 = ssub.s32 %s28, 1
        // Predicated region
        $region13: #{tpu_custom_call.1} parent=11 // pred_check
          %p352 = pneg %p101
        $region14: #{tpu_custom_call.1} parent=11 // pred_check_branch
          %354 = sbr.rel (%p352) target = $region16
        $region15: #{tpu_custom_call.1} parent=11 // pred_region
          _
        $region16: #{tpu_custom_call.1} parent=11 // pred_fallthru
          _
        // Predicated region
        $region17: #{tpu_custom_call.1} parent=11 // pred_check
          %p355 = pneg %p122
        $region18: #{tpu_custom_call.1} parent=11 // pred_check_branch
          %357 = sbr.rel (%p355) target = $region20
        $region19: #{tpu_custom_call.1} parent=11 // pred_region
          _
        $region20: #{tpu_custom_call.1} parent=11 // pred_fallthru
          _
        // Predicated region
        $region21: #{tpu_custom_call.1} parent=11 // pred_check
          %p358 = pneg %p143
        $region22: #{tpu_custom_call.1} parent=11 // pred_check_branch
          %360 = sbr.rel (%p358) target = $region24
        $region23: #{tpu_custom_call.1} parent=11 // pred_region
          _
        $region24: #{tpu_custom_call.1} parent=11 // pred_fallthru
          _
        // Predicated region
        $region25: #{tpu_custom_call.1} parent=11 // pred_check
          %p361 = pneg %p164
        $region26: #{tpu_custom_call.1} parent=11 // pred_check_branch
          %363 = sbr.rel (%p361) target = $region28
        $region27: #{tpu_custom_call.1} parent=11 // pred_region
          %365 = vsyncadd [#allocation6], 0
          %s366 = sshll.u32 %s5, 4
          %s367 = int_to_ptr.hbm [resolvable:$true] %s366
          %s368 = sshll.u32 [#allocation5], 4
          %s369 = int_to_ptr.vmem [resolvable:$true] %s368
          %374 = dma.hbm_to_vmem [thread:$0]  %s367, 512, %s369, [#allocation6], 128, 128, 8
        $region28: #{tpu_custom_call.1} parent=11 // pred_fallthru
          _
        // Predicated region
        $region29: #{tpu_custom_call.1} parent=11 // pred_check
          %p375 = pneg %p185
        $region30: #{tpu_custom_call.1} parent=11 // pred_check_branch
          %377 = sbr.rel (%p375) target = $region32
        $region31: #{tpu_custom_call.1} parent=11 // pred_region
          %379 = vsyncadd [#allocation6], 0
          %s380 = sshll.u32 %s6, 4
          %s381 = int_to_ptr.hbm [resolvable:$true] %s380
          %s382 = sshll.u32 [#allocation7], 4
          %s383 = int_to_ptr.vmem [resolvable:$true] %s382
          %388 = dma.hbm_to_vmem [thread:$0]  %s381, 512, %s383, [#allocation6], 128, 128, 8
        $region32: #{tpu_custom_call.1} parent=11 // pred_fallthru
          _
        // Predicated region
        $region33: #{tpu_custom_call.1} parent=11 // pred_check
          %p389 = pneg %p206
        $region34: #{tpu_custom_call.1} parent=11 // pred_check_branch
          %391 = sbr.rel (%p389) target = $region36
        $region35: #{tpu_custom_call.1} parent=11 // pred_region
          _
        $region36: #{tpu_custom_call.1} parent=11 // pred_fallthru
          _
        // Predicated region
        $region37: #{tpu_custom_call.1} parent=11 // pred_check
          %p392 = pneg %p227
        $region38: #{tpu_custom_call.1} parent=11 // pred_check_branch
          %394 = sbr.rel (%p392) target = $region40
        $region39: #{tpu_custom_call.1} parent=11 // pred_region
          %396 = vsyncadd [#allocation9], 0
          %s397 = sshll.u32 %s8, 4
          %s398 = int_to_ptr.hbm [resolvable:$true] %s397
          %s399 = sshll.u32 [#allocation8], 4
          %s400 = int_to_ptr.vmem [resolvable:$true] %s399
          %405 = dma.hbm_to_vmem [thread:$0]  %s398, 512, %s400, [#allocation9], 128, 128, 8
        $region40: #{tpu_custom_call.1} parent=11 // pred_fallthru
          _
        // Predicated region
        $region41: #{tpu_custom_call.1} parent=11 // pred_check
          %p406 = pneg %p248
        $region42: #{tpu_custom_call.1} parent=11 // pred_check_branch
          %408 = sbr.rel (%p406) target = $region44
        $region43: #{tpu_custom_call.1} parent=11 // pred_region
          %410 = vsyncadd [#allocation9], 0
          %s411 = sshll.u32 %s9, 4
          %s412 = int_to_ptr.hbm [resolvable:$true] %s411
          %s413 = sshll.u32 [#allocation10], 4
          %s414 = int_to_ptr.vmem [resolvable:$true] %s413
          %419 = dma.hbm_to_vmem [thread:$0]  %s412, 512, %s414, [#allocation9], 128, 128, 8
        $region44: #{tpu_custom_call.1} parent=11 // pred_fallthru
          _
        // Predicated region
        $region45: #{tpu_custom_call.1} parent=11 // pred_check
          %p420 = pneg %p269
        $region46: #{tpu_custom_call.1} parent=11 // pred_check_branch
          %422 = sbr.rel (%p420) target = $region48
        $region47: #{tpu_custom_call.1} parent=11 // pred_region
          _
        $region48: #{tpu_custom_call.1} parent=11 // pred_fallthru
          _
        // Predicated region
        $region49: #{tpu_custom_call.1} parent=11 // pred_check
          %p423 = pneg %p290
        $region50: #{tpu_custom_call.1} parent=11 // pred_check_branch
          %425 = sbr.rel (%p423) target = $region52
        $region51: #{tpu_custom_call.1} parent=11 // pred_region
          _
        $region52: #{tpu_custom_call.1} parent=11 // pred_fallthru
          _
        // Predicated region
        $region53: #{tpu_custom_call.1} parent=11 // pred_check
          %p426 = pneg %p311
        $region54: #{tpu_custom_call.1} parent=11 // pred_check_branch
          %428 = sbr.rel (%p426) target = $region56
        $region55: #{tpu_custom_call.1} parent=11 // pred_region
          %430 = vsyncadd [#allocation12], 0
          %s431 = sshll.u32 %s12, 4
          %s432 = int_to_ptr.hbm [resolvable:$true] %s431
          %s433 = sshll.u32 [#allocation11], 4
          %s434 = int_to_ptr.vmem [resolvable:$true] %s433
          %439 = dma.hbm_to_vmem [thread:$0]  %s432, 256, %s434, [#allocation12], 128, 128, 8
        $region56: #{tpu_custom_call.1} parent=11 // pred_fallthru
          _
      $region12: #{tpu_custom_call.1} parent=5 // pred_fallthru
        _
      %p440 = scmp.lt.s32.totalorder %s28, 2
      // Predicated region
      $region57: #{tpu_custom_call.1} parent=5 // pred_check
        %p441 = pneg %p440
      $region58: #{tpu_custom_call.1} parent=5 // pred_check_branch
        %443 = sbr.rel (%p441) target = $region60
      $region59: #{tpu_custom_call.1} parent=5 // pred_region
        // Predicated region
        $region61: #{tpu_custom_call.1} parent=59 // pred_check
          %p444 = pneg %p48
        $region62: #{tpu_custom_call.1} parent=59 // pred_check_branch
          %446 = sbr.rel (%p444) target = $region64
        $region63: #{tpu_custom_call.1} parent=59 // pred_region
          %s447 = sand.u32 %s38, 1
          %s448 = scalar_lea.sflag [#allocation3], %s447
          %s449 = sand.u32 %s38, 1
          %s450 = smul.addr %s449, 8
          %s451 = scalar_lea.vmem [#allocation2], %s450
          %453 = vsyncadd %s448, 0
          %s454 = smul.addr %s28, 8
          %s455 = scalar_lea.hbm %s0, %s454
          %s457 = sshll.u32 %s455, 4
          %s458 = int_to_ptr.hbm [resolvable:$true] %s457
          %s459 = sshll.u32 %s451, 4
          %s460 = int_to_ptr.vmem [resolvable:$true] %s459
          %462 = dma.hbm_to_vmem [thread:$0]  %s458, 128, %s460, %s448
        $region64: #{tpu_custom_call.1} parent=59 // pred_fallthru
          _
        // Predicated region
        $region65: #{tpu_custom_call.1} parent=59 // pred_check
          %p463 = pneg %p74
        $region66: #{tpu_custom_call.1} parent=59 // pred_check_branch
          %465 = sbr.rel (%p463) target = $region68
        $region67: #{tpu_custom_call.1} parent=59 // pred_region
          %p466 = scmp.lt.s32.totalorder %s28, 1
          %s467 = scalar_select %p466, %s28, 1
          %s468 = smul.addr %s467, 2
          %s469 = smul.addr %s468, 8
          %s470 = scalar_lea.vmem %s1, %s469
        $region68: #{tpu_custom_call.1} parent=59 // pred_fallthru
          _
      $region60: #{tpu_custom_call.1} parent=5 // pred_fallthru
        _
      %p471 = scmp.le.s32.totalorder 1, %s28
      %p472 = scmp.lt.s32.totalorder %s28, 3
      %p473 = pnand %p471, %p472
      %p474 = pneg %p473
      // Predicated region
      $region69: #{tpu_custom_call.1} parent=5 // pred_check
        _
      $region70: #{tpu_custom_call.1} parent=5 // pred_check_branch
        %476 = sbr.rel (%p473) target = $region72
      $region71: #{tpu_custom_call.1} parent=5 // pred_region
        %s477 = ssub.s32 %s28, 1
        %s478 = sand.u32 %s41, 1
        %s479 = scalar_lea.sflag [#allocation3], %s478
        %s480 = sand.u32 %s41, 1
        %s481 = smul.addr %s480, 8
        %s482 = scalar_lea.vmem [#allocation2], %s481
        // Predicated region
        $region73: #{tpu_custom_call.1} parent=71 // pred_check
          %p483 = pneg %p54
        $region74: #{tpu_custom_call.1} parent=71 // pred_check_branch
          %485 = sbr.rel (%p483) target = $region76
        $region75: #{tpu_custom_call.1} parent=71 // pred_region
          %487 = dma.done %s479, 128
        $region76: #{tpu_custom_call.1} parent=71 // pred_fallthru
          _
        // Predicated region
        $region77: #{tpu_custom_call.1} parent=71 // pred_check
          %p488 = pneg %p164
        $region78: #{tpu_custom_call.1} parent=71 // pred_check_branch
          %490 = sbr.rel (%p488) target = $region80
        $region79: #{tpu_custom_call.1} parent=71 // pred_region
          %492 = dma.done [#allocation6], 512
        $region80: #{tpu_custom_call.1} parent=71 // pred_fallthru
          _
        // Predicated region
        $region81: #{tpu_custom_call.1} parent=71 // pred_check
          %p493 = pneg %p185
        $region82: #{tpu_custom_call.1} parent=71 // pred_check_branch
          %495 = sbr.rel (%p493) target = $region84
        $region83: #{tpu_custom_call.1} parent=71 // pred_region
          %497 = dma.done [#allocation6], 512
        $region84: #{tpu_custom_call.1} parent=71 // pred_fallthru
          _
        // Predicated region
        $region85: #{tpu_custom_call.1} parent=71 // pred_check
          %p498 = pneg %p227
        $region86: #{tpu_custom_call.1} parent=71 // pred_check_branch
          %500 = sbr.rel (%p498) target = $region88
        $region87: #{tpu_custom_call.1} parent=71 // pred_region
          %502 = dma.done [#allocation9], 512
        $region88: #{tpu_custom_call.1} parent=71 // pred_fallthru
          _
        // Predicated region
        $region89: #{tpu_custom_call.1} parent=71 // pred_check
          %p503 = pneg %p248
        $region90: #{tpu_custom_call.1} parent=71 // pred_check_branch
          %505 = sbr.rel (%p503) target = $region92
        $region91: #{tpu_custom_call.1} parent=71 // pred_region
          %507 = dma.done [#allocation9], 512
        $region92: #{tpu_custom_call.1} parent=71 // pred_fallthru
          _
        // Predicated region
        $region93: #{tpu_custom_call.1} parent=71 // pred_check
          %p508 = pneg %p311
        $region94: #{tpu_custom_call.1} parent=71 // pred_check_branch
          %510 = sbr.rel (%p508) target = $region96
        $region95: #{tpu_custom_call.1} parent=71 // pred_region
          %512 = dma.done [#allocation12], 256
        $region96: #{tpu_custom_call.1} parent=71 // pred_fallthru
          _
        %s513 = sand.u32 %s41, 1
        %s514 = scalar_lea.sflag [#allocation3], %s513
        %s515 = sand.u32 %s41, 1
        %s516 = smul.addr %s515, 8
        %s517 = scalar_lea.vmem [#allocation2], %s516
        %p518 = pneg %p54
        %p519 = pneg %p51
        %p520 = scmp.lt.s32.totalorder %s33, 1
        %s521 = scalar_select %p520, %s33, 1
        %s522 = smul.addr %s521, 2
        %s523 = smul.addr %s522, 8
        %s524 = scalar_lea.vmem %s1, %s523
        %p525 = pneg %p80
        %p526 = pneg %p77
        %p527 = pneg %p101
        %p528 = pneg %p98
        %p529 = pneg %p122
        %p530 = pneg %p119
        %p531 = pneg %p143
        %p532 = pneg %p140
        %p533 = pneg %p164
        %p534 = pneg %p161
        %p535 = pneg %p185
        %p536 = pneg %p182
        %p537 = pneg %p206
        %p538 = pneg %p203
        %p539 = pneg %p227
        %p540 = pneg %p224
        %p541 = pneg %p248
        %p542 = pneg %p245
        %p543 = pneg %p269
        %p544 = pneg %p266
        %p545 = pneg %p290
        %p546 = pneg %p287
        %p547 = pneg %p311
        %p548 = pneg %p308
        %p549 = pneg %p337
        %p550 = pneg %p334
        %s551 = sand.u32 %s324, 1
        %s552 = scalar_lea.sflag [#allocation4], %s551
        %s553 = sand.u32 %s324, 1
        %s554 = smul.addr %s553, 8
        %s555 = scalar_lea.vmem [#allocation13], %s554
        %p556 = scmp.lt.s32.totalorder %s33, 1
        %s557 = scalar_select %p556, %s33, 1
        %s558 = smul.addr %s557, 2
        %s559 = smul.addr %s558, 8
        %s560 = scalar_lea.vmem %s1, %s559
        %v561 = vld [vmem:[#allocation11] sm:$0xff]
        %v562 = vld [vmem:[#allocation11 + $0x8] sm:$0x3]
        %v563 = vld [vmem:[%s482] sm:$0xff]
        %v564 = vld [vmem:[%s560] sm:$0xff]
        %v565 = vld [vmem:[%s560 + $0x8] sm:$0xff]
        %v566 = vld [vmem:[%s2] sm:$0xff]
        %v567 = vld [vmem:[%s2 + $0x8] sm:$0xff]
        %v568 = vld [vmem:[%s2 + $0x10] sm:$0xff]
        %v569 = vld [vmem:[%s2 + $0x18] sm:$0xff]
        %v570 = vld [vmem:[%s3] sm:$0x1]
        %v572 = vperm.slane %v570, 0
        %vm574 = vcmask 261120
        %v576 = vsel %vm574, %v563, 0
        %578 = vmatpush.msra.mxu0 0.0
        %579 = vmatpush.msra.mxu0 0.0
        %580 = vmatpush.msra.mxu0 0.0
        %581 = vmatpush.msra.mxu0 0.0
        %582 = vmatpush.msra.mxu0 0.0
        %583 = vmatpush.msra.mxu0 0.0
        %584 = vmatpush.msra.mxu0 0.0
        %585 = vmatpush.msra.mxu0 0.0
        %586 = vmatpush.msra.mxu0 0.0
        %587 = vmatpush.msra.mxu0 0.0
        %588 = vmatpush.msra.mxu0 0.0
        %589 = vmatpush.msra.mxu0 0.0
        %590 = vmatpush.msra.mxu0 %v569
        %591 = vmatpush.msra.mxu0 %v568
        %592 = vmatpush.msra.mxu0 %v567
        %593 = vmatpush.msra.mxu0 %v566
        %594 = vmatmul.f32.gmra.mxu0 %v576
        %v595 = vpop.f32.mrf.mxu0
        %v596 = vadd.f32 %v572, %v595
        %597 = vdwg.mxu0
        %v598 = vlaneseq
        %v599 = vshrl.u32 %v598, 7
        %v600 = vlaneseq
        %v601 = vand.u32 %v600, 127
        %vm602 = vcmp.gt.s32.totalorder %v601, %v599
        %v603 = vsel %vm602, -1e+30, 0.0
        %605 = vrot.lane.b32.xlu0 %v596, 96
        %v606 = vpop.permute.xlu0 %605
        %vm607 = vcmask 64512
        %v608 = vsel %vm607, %v596, 0
        %v610 = vsel %vm607, %v606, 0
        %612 = vmatpush.xpose.msra.mxu0 0.0
        %613 = vmatpush.xpose.msra.mxu0 0.0
        %614 = vmatpush.xpose.msra.mxu0 0.0
        %615 = vmatpush.xpose.msra.mxu0 0.0
        %616 = vmatpush.xpose.msra.mxu0 0.0
        %617 = vmatpush.xpose.msra.mxu0 0.0
        %618 = vmatpush.xpose.msra.mxu0 0.0
        %619 = vmatpush.xpose.msra.mxu0 0.0
        %620 = vmatpush.xpose.msra.mxu0 0.0
        %621 = vmatpush.xpose.msra.mxu0 0.0
        %622 = vmatpush.xpose.msra.mxu0 0.0
        %623 = vmatpush.xpose.msra.mxu0 0.0
        %624 = vmatpush.xpose.msra.mxu0 0.0
        %625 = vmatpush.xpose.msra.mxu0 0.0
        %626 = vmatpush.xpose.msra.mxu0 0.0
        %627 = vmatpush.xpose.msra.mxu0 %v610
        %628 = vmatmul.f32.gmra.mxu0 %v608
        %v629 = vpop.f32.mrf.mxu0
        %v630 = vadd.f32 %v603, %v629
        %631 = vdwg.mxu0
        %v632 = vsel %vm607, %v630, -inf
        %633 = vmax.xlane.f32.xlu0 %v632
        %v634 = vpop.xlane.xlu0 %633
        %v635 = vsub.f32 %v630, %v634
        %v636 = vmul.f32 %v635, 1.442695
        %v637 = vpow.pop %v636
        %v638 = vsel %vm607, %v637, 0.0
        %639 = vadd.xlane.f32.xlu0 %v638
        %v640 = vpop.xlane.xlu0 %639
        %v641 = vrcp.pop %v640
        %v642 = vmul.f32 %v637, %v641
        %643 = vrot.lane.b32.xlu0 %v596, 64
        %v644 = vpop.permute.xlu0 %643
        %v647 = vsel %vm607, %v642, 0
        %649 = vmatpush.msra.mxu0 0.0
        %650 = vmatpush.msra.mxu0 0.0
        %651 = vmatpush.msra.mxu0 0.0
        %652 = vmatpush.msra.mxu0 0.0
        %653 = vmatpush.msra.mxu0 0.0
        %654 = vmatpush.msra.mxu0 0.0
        %655 = vmatpush.msra.mxu0 0.0
        %656 = vmatpush.msra.mxu0 0.0
        %657 = vmatpush.msra.mxu0 0.0
        %658 = vmatpush.msra.mxu0 0.0
        %659 = vmatpush.msra.mxu0 0.0
        %660 = vmatpush.msra.mxu0 0.0
        %661 = vmatpush.msra.mxu0 0.0
        %662 = vmatpush.msra.mxu0 0.0
        %663 = vmatpush.msra.mxu0 0.0
        %664 = vmatpush.msra.mxu0 %v644
        %665 = vmatmul.f32.gmra.mxu0 %v647
        %v666 = vpop.f32.mrf.mxu0
        %v667 = vadd.f32 0.0, %v666
        %668 = vdwg.mxu0
        %v669 = vld [vmem:[%s4] sm:$0xff]
        %670 = vrot.lane.b32.xlu0 %v596, 120
        %v671 = vpop.permute.xlu0 %670
        %672 = vrot.lane.b32.xlu0 %v596, 88
        %v673 = vpop.permute.xlu0 %672
        %v674 = vsel %vm607, %v671, 0
        %v676 = vsel %vm607, %v673, 0
        %678 = vmatpush.xpose.msra.mxu0 0.0
        %679 = vmatpush.xpose.msra.mxu0 0.0
        %680 = vmatpush.xpose.msra.mxu0 0.0
        %681 = vmatpush.xpose.msra.mxu0 0.0
        %682 = vmatpush.xpose.msra.mxu0 0.0
        %683 = vmatpush.xpose.msra.mxu0 0.0
        %684 = vmatpush.xpose.msra.mxu0 0.0
        %685 = vmatpush.xpose.msra.mxu0 0.0
        %686 = vmatpush.xpose.msra.mxu0 0.0
        %687 = vmatpush.xpose.msra.mxu0 0.0
        %688 = vmatpush.xpose.msra.mxu0 0.0
        %689 = vmatpush.xpose.msra.mxu0 0.0
        %690 = vmatpush.xpose.msra.mxu0 0.0
        %691 = vmatpush.xpose.msra.mxu0 0.0
        %692 = vmatpush.xpose.msra.mxu0 0.0
        %693 = vmatpush.xpose.msra.mxu0 %v676
        %694 = vmatmul.f32.gmra.mxu0 %v674
        %v695 = vpop.f32.mrf.mxu0
        %v696 = vadd.f32 %v603, %v695
        %697 = vdwg.mxu0
        %v698 = vsel %vm607, %v696, -inf
        %699 = vmax.xlane.f32.xlu0 %v698
        %v700 = vpop.xlane.xlu0 %699
        %v701 = vsub.f32 %v696, %v700
        %v702 = vmul.f32 %v701, 1.442695
        %v703 = vpow.pop %v702
        %v704 = vsel %vm607, %v703, 0.0
        %705 = vadd.xlane.f32.xlu0 %v704
        %v706 = vpop.xlane.xlu0 %705
        %v707 = vrcp.pop %v706
        %v708 = vmul.f32 %v703, %v707
        %709 = vrot.lane.b32.xlu0 %v596, 56
        %v710 = vpop.permute.xlu0 %709
        %v713 = vsel %vm607, %v708, 0
        %715 = vmatpush.msra.mxu0 0.0
        %716 = vmatpush.msra.mxu0 0.0
        %717 = vmatpush.msra.mxu0 0.0
        %718 = vmatpush.msra.mxu0 0.0
        %719 = vmatpush.msra.mxu0 0.0
        %720 = vmatpush.msra.mxu0 0.0
        %721 = vmatpush.msra.mxu0 0.0
        %722 = vmatpush.msra.mxu0 0.0
        %723 = vmatpush.msra.mxu0 0.0
        %724 = vmatpush.msra.mxu0 0.0
        %725 = vmatpush.msra.mxu0 0.0
        %726 = vmatpush.msra.mxu0 0.0
        %727 = vmatpush.msra.mxu0 0.0
        %728 = vmatpush.msra.mxu0 0.0
        %729 = vmatpush.msra.mxu0 0.0
        %730 = vmatpush.msra.mxu0 %v710
        %731 = vmatmul.f32.gmra.mxu0 %v713
        %v732 = vpop.f32.mrf.mxu0
        %v733 = vadd.f32 0.0, %v732
        %734 = vdwg.mxu0
        %v735 = vld [vmem:[%s4 + $0x8] sm:$0xff]
        %v737 = vsel %vm607, %v733, 0
        %739 = vmatpush.msra.mxu0 0.0
        %740 = vmatpush.msra.mxu0 0.0
        %741 = vmatpush.msra.mxu0 0.0
        %742 = vmatpush.msra.mxu0 0.0
        %743 = vmatpush.msra.mxu0 0.0
        %744 = vmatpush.msra.mxu0 0.0
        %745 = vmatpush.msra.mxu0 0.0
        %746 = vmatpush.msra.mxu0 0.0
        %747 = vmatpush.msra.mxu0 0.0
        %748 = vmatpush.msra.mxu0 0.0
        %749 = vmatpush.msra.mxu0 0.0
        %750 = vmatpush.msra.mxu0 0.0
        %751 = vmatpush.msra.mxu0 0.0
        %752 = vmatpush.msra.mxu0 0.0
        %753 = vmatpush.msra.mxu0 0.0
        %754 = vmatpush.msra.mxu0 %v735
        %755 = vmatmul.f32.gmra.mxu0 %v737
        %v756 = vpop.f32.mrf.mxu0
        %v757 = vadd.f32 0.0, %v756
        %758 = vdwg.mxu0
        %v760 = vsel %vm607, %v667, 0
        %762 = vmatpush.msra.mxu0 0.0
        %763 = vmatpush.msra.mxu0 0.0
        %764 = vmatpush.msra.mxu0 0.0
        %765 = vmatpush.msra.mxu0 0.0
        %766 = vmatpush.msra.mxu0 0.0
        %767 = vmatpush.msra.mxu0 0.0
        %768 = vmatpush.msra.mxu0 0.0
        %769 = vmatpush.msra.mxu0 0.0
        %770 = vmatpush.msra.mxu0 0.0
        %771 = vmatpush.msra.mxu0 0.0
        %772 = vmatpush.msra.mxu0 0.0
        %773 = vmatpush.msra.mxu0 0.0
        %774 = vmatpush.msra.mxu0 0.0
        %775 = vmatpush.msra.mxu0 0.0
        %776 = vmatpush.msra.mxu0 0.0
        %777 = vmatpush.msra.mxu0 %v669
        %778 = vmatmul.f32.gmra.mxu0 %v760
        %v779 = vpop.f32.mrf.mxu0
        %v780 = vadd.f32 %v757, %v779
        %781 = vdwg.mxu0
        %782 = vrot.lane.b32.xlu0 %v596, 112
        %v783 = vpop.permute.xlu0 %782
        %784 = vrot.lane.b32.xlu0 %v596, 80
        %v785 = vpop.permute.xlu0 %784
        %v786 = vsel %vm607, %v783, 0
        %v788 = vsel %vm607, %v785, 0
        %790 = vmatpush.xpose.msra.mxu0 0.0
        %791 = vmatpush.xpose.msra.mxu0 0.0
        %792 = vmatpush.xpose.msra.mxu0 0.0
        %793 = vmatpush.xpose.msra.mxu0 0.0
        %794 = vmatpush.xpose.msra.mxu0 0.0
        %795 = vmatpush.xpose.msra.mxu0 0.0
        %796 = vmatpush.xpose.msra.mxu0 0.0
        %797 = vmatpush.xpose.msra.mxu0 0.0
        %798 = vmatpush.xpose.msra.mxu0 0.0
        %799 = vmatpush.xpose.msra.mxu0 0.0
        %800 = vmatpush.xpose.msra.mxu0 0.0
        %801 = vmatpush.xpose.msra.mxu0 0.0
        %802 = vmatpush.xpose.msra.mxu0 0.0
        %803 = vmatpush.xpose.msra.mxu0 0.0
        %804 = vmatpush.xpose.msra.mxu0 0.0
        %805 = vmatpush.xpose.msra.mxu0 %v788
        %806 = vmatmul.f32.gmra.mxu0 %v786
        %v807 = vpop.f32.mrf.mxu0
        %v808 = vadd.f32 %v603, %v807
        %809 = vdwg.mxu0
        %v810 = vsel %vm607, %v808, -inf
        %811 = vmax.xlane.f32.xlu0 %v810
        %v812 = vpop.xlane.xlu0 %811
        %v813 = vsub.f32 %v808, %v812
        %v814 = vmul.f32 %v813, 1.442695
        %v815 = vpow.pop %v814
        %v816 = vsel %vm607, %v815, 0.0
        %817 = vadd.xlane.f32.xlu0 %v816
        %v818 = vpop.xlane.xlu0 %817
        %v819 = vrcp.pop %v818
        %v820 = vmul.f32 %v815, %v819
        %821 = vrot.lane.b32.xlu0 %v596, 48
        %v822 = vpop.permute.xlu0 %821
        %v825 = vsel %vm607, %v820, 0
        %827 = vmatpush.msra.mxu0 0.0
        %828 = vmatpush.msra.mxu0 0.0
        %829 = vmatpush.msra.mxu0 0.0
        %830 = vmatpush.msra.mxu0 0.0
        %831 = vmatpush.msra.mxu0 0.0
        %832 = vmatpush.msra.mxu0 0.0
        %833 = vmatpush.msra.mxu0 0.0
        %834 = vmatpush.msra.mxu0 0.0
        %835 = vmatpush.msra.mxu0 0.0
        %836 = vmatpush.msra.mxu0 0.0
        %837 = vmatpush.msra.mxu0 0.0
        %838 = vmatpush.msra.mxu0 0.0
        %839 = vmatpush.msra.mxu0 0.0
        %840 = vmatpush.msra.mxu0 0.0
        %841 = vmatpush.msra.mxu0 0.0
        %842 = vmatpush.msra.mxu0 %v822
        %843 = vmatmul.f32.gmra.mxu0 %v825
        %v844 = vpop.f32.mrf.mxu0
        %v845 = vadd.f32 0.0, %v844
        %846 = vdwg.mxu0
        %v847 = vld [vmem:[%s4 + $0x10] sm:$0xff]
        %v849 = vsel %vm607, %v845, 0
        %851 = vmatpush.msra.mxu0 0.0
        %852 = vmatpush.msra.mxu0 0.0
        %853 = vmatpush.msra.mxu0 0.0
        %854 = vmatpush.msra.mxu0 0.0
        %855 = vmatpush.msra.mxu0 0.0
        %856 = vmatpush.msra.mxu0 0.0
        %857 = vmatpush.msra.mxu0 0.0
        %858 = vmatpush.msra.mxu0 0.0
        %859 = vmatpush.msra.mxu0 0.0
        %860 = vmatpush.msra.mxu0 0.0
        %861 = vmatpush.msra.mxu0 0.0
        %862 = vmatpush.msra.mxu0 0.0
        %863 = vmatpush.msra.mxu0 0.0
        %864 = vmatpush.msra.mxu0 0.0
        %865 = vmatpush.msra.mxu0 0.0
        %866 = vmatpush.msra.mxu0 %v847
        %867 = vmatmul.f32.gmra.mxu0 %v849
        %v868 = vpop.f32.mrf.mxu0
        %v869 = vadd.f32 0.0, %v868
        %870 = vdwg.mxu0
        %v871 = vadd.f32 %v780, %v869
        %872 = vrot.lane.b32.xlu0 %v596, 104
        %v873 = vpop.permute.xlu0 %872
        %874 = vrot.lane.b32.xlu0 %v596, 72
        %v875 = vpop.permute.xlu0 %874
        %v876 = vsel %vm607, %v873, 0
        %v878 = vsel %vm607, %v875, 0
        %880 = vmatpush.xpose.msra.mxu0 0.0
        %881 = vmatpush.xpose.msra.mxu0 0.0
        %882 = vmatpush.xpose.msra.mxu0 0.0
        %883 = vmatpush.xpose.msra.mxu0 0.0
        %884 = vmatpush.xpose.msra.mxu0 0.0
        %885 = vmatpush.xpose.msra.mxu0 0.0
        %886 = vmatpush.xpose.msra.mxu0 0.0
        %887 = vmatpush.xpose.msra.mxu0 0.0
        %888 = vmatpush.xpose.msra.mxu0 0.0
        %889 = vmatpush.xpose.msra.mxu0 0.0
        %890 = vmatpush.xpose.msra.mxu0 0.0
        %891 = vmatpush.xpose.msra.mxu0 0.0
        %892 = vmatpush.xpose.msra.mxu0 0.0
        %893 = vmatpush.xpose.msra.mxu0 0.0
        %894 = vmatpush.xpose.msra.mxu0 0.0
        %895 = vmatpush.xpose.msra.mxu0 %v878
        %896 = vmatmul.f32.gmra.mxu0 %v876
        %v897 = vpop.f32.mrf.mxu0
        %v898 = vadd.f32 %v603, %v897
        %899 = vdwg.mxu0
        %v900 = vsel %vm607, %v898, -inf
        %901 = vmax.xlane.f32.xlu0 %v900
        %v902 = vpop.xlane.xlu0 %901
        %v903 = vsub.f32 %v898, %v902
        %v904 = vmul.f32 %v903, 1.442695
        %v905 = vpow.pop %v904
        %v906 = vsel %vm607, %v905, 0.0
        %907 = vadd.xlane.f32.xlu0 %v906
        %v908 = vpop.xlane.xlu0 %907
        %v909 = vrcp.pop %v908
        %v910 = vmul.f32 %v905, %v909
        %911 = vrot.lane.b32.xlu0 %v596, 40
        %v912 = vpop.permute.xlu0 %911
        %v915 = vsel %vm607, %v910, 0
        %917 = vmatpush.msra.mxu0 0.0
        %918 = vmatpush.msra.mxu0 0.0
        %919 = vmatpush.msra.mxu0 0.0
        %920 = vmatpush.msra.mxu0 0.0
        %921 = vmatpush.msra.mxu0 0.0
        %922 = vmatpush.msra.mxu0 0.0
        %923 = vmatpush.msra.mxu0 0.0
        %924 = vmatpush.msra.mxu0 0.0
        %925 = vmatpush.msra.mxu0 0.0
        %926 = vmatpush.msra.mxu0 0.0
        %927 = vmatpush.msra.mxu0 0.0
        %928 = vmatpush.msra.mxu0 0.0
        %929 = vmatpush.msra.mxu0 0.0
        %930 = vmatpush.msra.mxu0 0.0
        %931 = vmatpush.msra.mxu0 0.0
        %932 = vmatpush.msra.mxu0 %v912
        %933 = vmatmul.f32.gmra.mxu0 %v915
        %v934 = vpop.f32.mrf.mxu0
        %v935 = vadd.f32 0.0, %v934
        %936 = vdwg.mxu0
        %v937 = vld [vmem:[%s4 + $0x18] sm:$0xff]
        %v939 = vsel %vm607, %v935, 0
        %941 = vmatpush.msra.mxu0 0.0
        %942 = vmatpush.msra.mxu0 0.0
        %943 = vmatpush.msra.mxu0 0.0
        %944 = vmatpush.msra.mxu0 0.0
        %945 = vmatpush.msra.mxu0 0.0
        %946 = vmatpush.msra.mxu0 0.0
        %947 = vmatpush.msra.mxu0 0.0
        %948 = vmatpush.msra.mxu0 0.0
        %949 = vmatpush.msra.mxu0 0.0
        %950 = vmatpush.msra.mxu0 0.0
        %951 = vmatpush.msra.mxu0 0.0
        %952 = vmatpush.msra.mxu0 0.0
        %953 = vmatpush.msra.mxu0 0.0
        %954 = vmatpush.msra.mxu0 0.0
        %955 = vmatpush.msra.mxu0 0.0
        %956 = vmatpush.msra.mxu0 %v937
        %957 = vmatmul.f32.gmra.mxu0 %v939
        %v958 = vpop.f32.mrf.mxu0
        %v959 = vadd.f32 0.0, %v958
        %960 = vdwg.mxu0
        %v961 = vadd.f32 %v871, %v959
        %v962 = vperm.slane %v561, 1
        %v963 = vadd.f32 %v961, %v962
        %v964 = vadd.f32 %v563, %v963
        %v965 = vsel %vm574, %v964, 0.0
        %966 = vadd.xlane.f32.xlu0 %v965
        %v967 = vpop.xlane.xlu0 %966
        %v968 = vrcp.pop 32.0
        %v969 = vmul.f32 32.0, %v968
        %v970 = vsub.f32 1.0, %v969
        %v971 = vmul.f32 %v968, %v970
        %v972 = vadd.f32 %v968, %v971
        %vm973 = vweird.f32 %v968
        %v974 = vsel %vm973, %v968, %v972
        %v975 = vmul.f32 %v967, %v974
        %v976 = vsub.f32 %v964, %v975
        %v977 = vmul.f32 %v976, %v976
        %v978 = vsel %vm574, %v977, 0.0
        %979 = vadd.xlane.f32.xlu0 %v978
        %v980 = vpop.xlane.xlu0 %979
        %v981 = vmul.f32 %v980, %v974
        %v982 = vadd.f32 %v981, 1e-05
        %v983 = vrsqrt.pop %v982
        %v984 = vmul.f32 %v983, %v982
        %v985 = vmul.f32 %v984, %v983
        %v986 = vmul.f32 0.5, %v985
        %v987 = vsub.f32 1.5, %v986
        %v988 = vmul.f32 %v983, %v987
        %vm989 = vweird.f32 %v982
        %vm990 = vweird.f32 %v983
        %vm991 = vmor %vm989, %vm990
        %v992 = vsel %vm991, %v983, %v988
        %v993 = vmul.f32 %v976, %v992
        %v994 = vperm.slane %v561, 4
        %v995 = vmul.f32 %v993, %v994
        %v996 = vperm.slane %v561, 5
        %v997 = vadd.f32 %v995, %v996
        %v998 = vld [vmem:[#allocation5] sm:$0xff]
        %v999 = vld [vmem:[#allocation5 + $0x8] sm:$0xff]
        %v1000 = vld [vmem:[#allocation5 + $0x10] sm:$0xff]
        %v1001 = vld [vmem:[#allocation5 + $0x18] sm:$0xff]
        %v1002 = vperm.slane %v561, 0
        %v1004 = vsel %vm574, %v997, 0
        %1006 = vmatpush.msra.mxu0 0.0
        %1007 = vmatpush.msra.mxu0 0.0
        %1008 = vmatpush.msra.mxu0 0.0
        %1009 = vmatpush.msra.mxu0 0.0
        %1010 = vmatpush.msra.mxu0 0.0
        %1011 = vmatpush.msra.mxu0 0.0
        %1012 = vmatpush.msra.mxu0 0.0
        %1013 = vmatpush.msra.mxu0 0.0
        %1014 = vmatpush.msra.mxu0 0.0
        %1015 = vmatpush.msra.mxu0 0.0
        %1016 = vmatpush.msra.mxu0 0.0
        %1017 = vmatpush.msra.mxu0 0.0
        %1018 = vmatpush.msra.mxu0 %v1001
        %1019 = vmatpush.msra.mxu0 %v1000
        %1020 = vmatpush.msra.mxu0 %v999
        %1021 = vmatpush.msra.mxu0 %v998
        %1022 = vmatmul.f32.gmra.mxu0 %v1004
        %v1023 = vpop.f32.mrf.mxu0
        %v1024 = vadd.f32 %v1002, %v1023
        %1025 = vdwg.mxu0
        %v1026 = vld [vmem:[#allocation7] sm:$0xff]
        %v1027 = vld [vmem:[#allocation7 + $0x8] sm:$0xff]
        %v1028 = vld [vmem:[#allocation7 + $0x10] sm:$0xff]
        %v1029 = vld [vmem:[#allocation7 + $0x18] sm:$0xff]
        %v1030 = vld [vmem:[%s7] sm:$0x1]
        %v1032 = vperm.slane %v1030, 0
        %v1035 = vsel %vm574, %v564, 0
        %v1038 = vsel %vm574, %v565, 0
        %1040 = vmatpush.msra.mxu0 0.0
        %1041 = vmatpush.msra.mxu0 0.0
        %1042 = vmatpush.msra.mxu0 0.0
        %1043 = vmatpush.msra.mxu0 0.0
        %1044 = vmatpush.msra.mxu0 0.0
        %1045 = vmatpush.msra.mxu0 0.0
        %1046 = vmatpush.msra.mxu0 0.0
        %1047 = vmatpush.msra.mxu0 0.0
        %1048 = vmatpush.msra.mxu0 0.0
        %1049 = vmatpush.msra.mxu0 0.0
        %1050 = vmatpush.msra.mxu0 0.0
        %1051 = vmatpush.msra.mxu0 0.0
        %1052 = vmatpush.msra.mxu0 %v1029
        %1053 = vmatpush.msra.mxu0 %v1028
        %1054 = vmatpush.msra.mxu0 %v1027
        %1055 = vmatpush.msra.mxu0 %v1026
        %1056 = vmatmul.f32.gmra.mxu0 %v1035
        %v1057 = vpop.f32.mrf.mxu0
        %v1058 = vadd.f32 %v1032, %v1057
        %1059 = vmatmul.f32.gmra.mxu0 %v1038
        %v1060 = vpop.f32.mrf.mxu0
        %v1061 = vadd.f32 %v1032, %v1060
        %1062 = vdwg.mxu0
        %v1064 = vsel %vm607, %v1024, 0
        %v1067 = vsel %vm607, %v1058, 0
        %v1070 = vsel %vm607, %v1061, 0
        %1072 = vmatpush.xpose.msra.mxu0 0.0
        %1073 = vmatpush.xpose.msra.mxu0 0.0
        %1074 = vmatpush.xpose.msra.mxu0 0.0
        %1075 = vmatpush.xpose.msra.mxu0 0.0
        %1076 = vmatpush.xpose.msra.mxu0 0.0
        %1077 = vmatpush.xpose.msra.mxu0 0.0
        %1078 = vmatpush.xpose.msra.mxu0 0.0
        %1079 = vmatpush.xpose.msra.mxu0 0.0
        %1080 = vmatpush.xpose.msra.mxu0 0.0
        %1081 = vmatpush.xpose.msra.mxu0 0.0
        %1082 = vmatpush.xpose.msra.mxu0 0.0
        %1083 = vmatpush.xpose.msra.mxu0 0.0
        %1084 = vmatpush.xpose.msra.mxu0 0.0
        %1085 = vmatpush.xpose.msra.mxu0 0.0
        %1086 = vmatpush.xpose.msra.mxu0 %v1070
        %1087 = vmatpush.xpose.msra.mxu0 %v1067
        %1088 = vmatmul.f32.gmra.mxu0 %v1064
        %v1089 = vpop.f32.mrf.mxu0
        %v1090 = vadd.f32 0.0, %v1089
        %1091 = vdwg.mxu0
        %vm1092 = vcmask 130048
        %v1093 = vsel %vm1092, %v1090, -inf
        %1094 = vmax.xlane.f32.xlu0 %v1093
        %v1095 = vpop.xlane.xlu0 %1094
        %v1096 = vsub.f32 %v1090, %v1095
        %v1097 = vmul.f32 %v1096, 1.442695
        %v1098 = vpow.pop %v1097
        %v1099 = vsel %vm1092, %v1098, 0.0
        %1100 = vadd.xlane.f32.xlu0 %v1099
        %v1101 = vpop.xlane.xlu0 %1100
        %v1102 = vrcp.pop %v1101
        %v1103 = vmul.f32 %v1098, %v1102
        %1104 = vrot.lane.b32.xlu0 %v1058, 96
        %v1105 = vpop.permute.xlu0 %1104
        %1106 = vrot.lane.b32.xlu0 %v1061, 96
        %v1107 = vpop.permute.xlu0 %1106
        %v1111 = vsel %vm1092, %v1103, 0
        %1113 = vmatpush.msra.mxu0 0.0
        %1114 = vmatpush.msra.mxu0 0.0
        %1115 = vmatpush.msra.mxu0 0.0
        %1116 = vmatpush.msra.mxu0 0.0
        %1117 = vmatpush.msra.mxu0 0.0
        %1118 = vmatpush.msra.mxu0 0.0
        %1119 = vmatpush.msra.mxu0 0.0
        %1120 = vmatpush.msra.mxu0 0.0
        %1121 = vmatpush.msra.mxu0 0.0
        %1122 = vmatpush.msra.mxu0 0.0
        %1123 = vmatpush.msra.mxu0 0.0
        %1124 = vmatpush.msra.mxu0 0.0
        %1125 = vmatpush.msra.mxu0 0.0
        %1126 = vmatpush.msra.mxu0 0.0
        %1127 = vmatpush.msra.mxu0 %v1107
        %1128 = vmatpush.msra.mxu0 %v1105
        %1129 = vmatmul.f32.gmra.mxu0 %v1111
        %v1130 = vpop.f32.mrf.mxu0
        %v1131 = vadd.f32 0.0, %v1130
        %1132 = vdwg.mxu0
        %v1133 = vld [vmem:[#allocation8] sm:$0xff]
        %1134 = vrot.lane.b32.xlu0 %v1024, 120
        %v1135 = vpop.permute.xlu0 %1134
        %1136 = vrot.lane.b32.xlu0 %v1058, 120
        %v1137 = vpop.permute.xlu0 %1136
        %1138 = vrot.lane.b32.xlu0 %v1061, 120
        %v1139 = vpop.permute.xlu0 %1138
        %v1140 = vsel %vm607, %v1135, 0
        %v1142 = vsel %vm607, %v1137, 0
        %v1144 = vsel %vm607, %v1139, 0
        %1146 = vmatpush.xpose.msra.mxu0 0.0
        %1147 = vmatpush.xpose.msra.mxu0 0.0
        %1148 = vmatpush.xpose.msra.mxu0 0.0
        %1149 = vmatpush.xpose.msra.mxu0 0.0
        %1150 = vmatpush.xpose.msra.mxu0 0.0
        %1151 = vmatpush.xpose.msra.mxu0 0.0
        %1152 = vmatpush.xpose.msra.mxu0 0.0
        %1153 = vmatpush.xpose.msra.mxu0 0.0
        %1154 = vmatpush.xpose.msra.mxu0 0.0
        %1155 = vmatpush.xpose.msra.mxu0 0.0
        %1156 = vmatpush.xpose.msra.mxu0 0.0
        %1157 = vmatpush.xpose.msra.mxu0 0.0
        %1158 = vmatpush.xpose.msra.mxu0 0.0
        %1159 = vmatpush.xpose.msra.mxu0 0.0
        %1160 = vmatpush.xpose.msra.mxu0 %v1144
        %1161 = vmatpush.xpose.msra.mxu0 %v1142
        %1162 = vmatmul.f32.gmra.mxu0 %v1140
        %v1163 = vpop.f32.mrf.mxu0
        %v1164 = vadd.f32 0.0, %v1163
        %1165 = vdwg.mxu0
        %v1166 = vsel %vm1092, %v1164, -inf
        %1167 = vmax.xlane.f32.xlu0 %v1166
        %v1168 = vpop.xlane.xlu0 %1167
        %v1169 = vsub.f32 %v1164, %v1168
        %v1170 = vmul.f32 %v1169, 1.442695
        %v1171 = vpow.pop %v1170
        %v1172 = vsel %vm1092, %v1171, 0.0
        %1173 = vadd.xlane.f32.xlu0 %v1172
        %v1174 = vpop.xlane.xlu0 %1173
        %v1175 = vrcp.pop %v1174
        %v1176 = vmul.f32 %v1171, %v1175
        %1177 = vrot.lane.b32.xlu0 %v1058, 88
        %v1178 = vpop.permute.xlu0 %1177
        %1179 = vrot.lane.b32.xlu0 %v1061, 88
        %v1180 = vpop.permute.xlu0 %1179
        %v1184 = vsel %vm1092, %v1176, 0
        %1186 = vmatpush.msra.mxu0 0.0
        %1187 = vmatpush.msra.mxu0 0.0
        %1188 = vmatpush.msra.mxu0 0.0
        %1189 = vmatpush.msra.mxu0 0.0
        %1190 = vmatpush.msra.mxu0 0.0
        %1191 = vmatpush.msra.mxu0 0.0
        %1192 = vmatpush.msra.mxu0 0.0
        %1193 = vmatpush.msra.mxu0 0.0
        %1194 = vmatpush.msra.mxu0 0.0
        %1195 = vmatpush.msra.mxu0 0.0
        %1196 = vmatpush.msra.mxu0 0.0
        %1197 = vmatpush.msra.mxu0 0.0
        %1198 = vmatpush.msra.mxu0 0.0
        %1199 = vmatpush.msra.mxu0 0.0
        %1200 = vmatpush.msra.mxu0 %v1180
        %1201 = vmatpush.msra.mxu0 %v1178
        %1202 = vmatmul.f32.gmra.mxu0 %v1184
        %v1203 = vpop.f32.mrf.mxu0
        %v1204 = vadd.f32 0.0, %v1203
        %1205 = vdwg.mxu0
        %v1206 = vld [vmem:[#allocation8 + $0x8] sm:$0xff]
        %v1208 = vsel %vm607, %v1204, 0
        %1210 = vmatpush.msra.mxu0 0.0
        %1211 = vmatpush.msra.mxu0 0.0
        %1212 = vmatpush.msra.mxu0 0.0
        %1213 = vmatpush.msra.mxu0 0.0
        %1214 = vmatpush.msra.mxu0 0.0
        %1215 = vmatpush.msra.mxu0 0.0
        %1216 = vmatpush.msra.mxu0 0.0
        %1217 = vmatpush.msra.mxu0 0.0
        %1218 = vmatpush.msra.mxu0 0.0
        %1219 = vmatpush.msra.mxu0 0.0
        %1220 = vmatpush.msra.mxu0 0.0
        %1221 = vmatpush.msra.mxu0 0.0
        %1222 = vmatpush.msra.mxu0 0.0
        %1223 = vmatpush.msra.mxu0 0.0
        %1224 = vmatpush.msra.mxu0 0.0
        %1225 = vmatpush.msra.mxu0 %v1206
        %1226 = vmatmul.f32.gmra.mxu0 %v1208
        %v1227 = vpop.f32.mrf.mxu0
        %v1228 = vadd.f32 0.0, %v1227
        %1229 = vdwg.mxu0
        %v1231 = vsel %vm607, %v1131, 0
        %1233 = vmatpush.msra.mxu0 0.0
        %1234 = vmatpush.msra.mxu0 0.0
        %1235 = vmatpush.msra.mxu0 0.0
        %1236 = vmatpush.msra.mxu0 0.0
        %1237 = vmatpush.msra.mxu0 0.0
        %1238 = vmatpush.msra.mxu0 0.0
        %1239 = vmatpush.msra.mxu0 0.0
        %1240 = vmatpush.msra.mxu0 0.0
        %1241 = vmatpush.msra.mxu0 0.0
        %1242 = vmatpush.msra.mxu0 0.0
        %1243 = vmatpush.msra.mxu0 0.0
        %1244 = vmatpush.msra.mxu0 0.0
        %1245 = vmatpush.msra.mxu0 0.0
        %1246 = vmatpush.msra.mxu0 0.0
        %1247 = vmatpush.msra.mxu0 0.0
        %1248 = vmatpush.msra.mxu0 %v1133
        %1249 = vmatmul.f32.gmra.mxu0 %v1231
        %v1250 = vpop.f32.mrf.mxu0
        %v1251 = vadd.f32 %v1228, %v1250
        %1252 = vdwg.mxu0
        %1253 = vrot.lane.b32.xlu0 %v1024, 112
        %v1254 = vpop.permute.xlu0 %1253
        %1255 = vrot.lane.b32.xlu0 %v1058, 112
        %v1256 = vpop.permute.xlu0 %1255
        %1257 = vrot.lane.b32.xlu0 %v1061, 112
        %v1258 = vpop.permute.xlu0 %1257
        %v1259 = vsel %vm607, %v1254, 0
        %v1261 = vsel %vm607, %v1256, 0
        %v1263 = vsel %vm607, %v1258, 0
        %1265 = vmatpush.xpose.msra.mxu0 0.0
        %1266 = vmatpush.xpose.msra.mxu0 0.0
        %1267 = vmatpush.xpose.msra.mxu0 0.0
        %1268 = vmatpush.xpose.msra.mxu0 0.0
        %1269 = vmatpush.xpose.msra.mxu0 0.0
        %1270 = vmatpush.xpose.msra.mxu0 0.0
        %1271 = vmatpush.xpose.msra.mxu0 0.0
        %1272 = vmatpush.xpose.msra.mxu0 0.0
        %1273 = vmatpush.xpose.msra.mxu0 0.0
        %1274 = vmatpush.xpose.msra.mxu0 0.0
        %1275 = vmatpush.xpose.msra.mxu0 0.0
        %1276 = vmatpush.xpose.msra.mxu0 0.0
        %1277 = vmatpush.xpose.msra.mxu0 0.0
        %1278 = vmatpush.xpose.msra.mxu0 0.0
        %1279 = vmatpush.xpose.msra.mxu0 %v1263
        %1280 = vmatpush.xpose.msra.mxu0 %v1261
        %1281 = vmatmul.f32.gmra.mxu0 %v1259
        %v1282 = vpop.f32.mrf.mxu0
        %v1283 = vadd.f32 0.0, %v1282
        %1284 = vdwg.mxu0
        %v1285 = vsel %vm1092, %v1283, -inf
        %1286 = vmax.xlane.f32.xlu0 %v1285
        %v1287 = vpop.xlane.xlu0 %1286
        %v1288 = vsub.f32 %v1283, %v1287
        %v1289 = vmul.f32 %v1288, 1.442695
        %v1290 = vpow.pop %v1289
        %v1291 = vsel %vm1092, %v1290, 0.0
        %1292 = vadd.xlane.f32.xlu0 %v1291
        %v1293 = vpop.xlane.xlu0 %1292
        %v1294 = vrcp.pop %v1293
        %v1295 = vmul.f32 %v1290, %v1294
        %1296 = vrot.lane.b32.xlu0 %v1058, 80
        %v1297 = vpop.permute.xlu0 %1296
        %1298 = vrot.lane.b32.xlu0 %v1061, 80
        %v1299 = vpop.permute.xlu0 %1298
        %v1303 = vsel %vm1092, %v1295, 0
        %1305 = vmatpush.msra.mxu0 0.0
        %1306 = vmatpush.msra.mxu0 0.0
        %1307 = vmatpush.msra.mxu0 0.0
        %1308 = vmatpush.msra.mxu0 0.0
        %1309 = vmatpush.msra.mxu0 0.0
        %1310 = vmatpush.msra.mxu0 0.0
        %1311 = vmatpush.msra.mxu0 0.0
        %1312 = vmatpush.msra.mxu0 0.0
        %1313 = vmatpush.msra.mxu0 0.0
        %1314 = vmatpush.msra.mxu0 0.0
        %1315 = vmatpush.msra.mxu0 0.0
        %1316 = vmatpush.msra.mxu0 0.0
        %1317 = vmatpush.msra.mxu0 0.0
        %1318 = vmatpush.msra.mxu0 0.0
        %1319 = vmatpush.msra.mxu0 %v1299
        %1320 = vmatpush.msra.mxu0 %v1297
        %1321 = vmatmul.f32.gmra.mxu0 %v1303
        %v1322 = vpop.f32.mrf.mxu0
        %v1323 = vadd.f32 0.0, %v1322
        %1324 = vdwg.mxu0
        %v1325 = vld [vmem:[#allocation8 + $0x10] sm:$0xff]
        %v1327 = vsel %vm607, %v1323, 0
        %1329 = vmatpush.msra.mxu0 0.0
        %1330 = vmatpush.msra.mxu0 0.0
        %1331 = vmatpush.msra.mxu0 0.0
        %1332 = vmatpush.msra.mxu0 0.0
        %1333 = vmatpush.msra.mxu0 0.0
        %1334 = vmatpush.msra.mxu0 0.0
        %1335 = vmatpush.msra.mxu0 0.0
        %1336 = vmatpush.msra.mxu0 0.0
        %1337 = vmatpush.msra.mxu0 0.0
        %1338 = vmatpush.msra.mxu0 0.0
        %1339 = vmatpush.msra.mxu0 0.0
        %1340 = vmatpush.msra.mxu0 0.0
        %1341 = vmatpush.msra.mxu0 0.0
        %1342 = vmatpush.msra.mxu0 0.0
        %1343 = vmatpush.msra.mxu0 0.0
        %1344 = vmatpush.msra.mxu0 %v1325
        %1345 = vmatmul.f32.gmra.mxu0 %v1327
        %v1346 = vpop.f32.mrf.mxu0
        %v1347 = vadd.f32 0.0, %v1346
        %1348 = vdwg.mxu0
        %v1349 = vadd.f32 %v1251, %v1347
        %1350 = vrot.lane.b32.xlu0 %v1024, 104
        %v1351 = vpop.permute.xlu0 %1350
        %1352 = vrot.lane.b32.xlu0 %v1058, 104
        %v1353 = vpop.permute.xlu0 %1352
        %1354 = vrot.lane.b32.xlu0 %v1061, 104
        %v1355 = vpop.permute.xlu0 %1354
        %v1356 = vsel %vm607, %v1351, 0
        %v1358 = vsel %vm607, %v1353, 0
        %v1360 = vsel %vm607, %v1355, 0
        %1362 = vmatpush.xpose.msra.mxu0 0.0
        %1363 = vmatpush.xpose.msra.mxu0 0.0
        %1364 = vmatpush.xpose.msra.mxu0 0.0
        %1365 = vmatpush.xpose.msra.mxu0 0.0
        %1366 = vmatpush.xpose.msra.mxu0 0.0
        %1367 = vmatpush.xpose.msra.mxu0 0.0
        %1368 = vmatpush.xpose.msra.mxu0 0.0
        %1369 = vmatpush.xpose.msra.mxu0 0.0
        %1370 = vmatpush.xpose.msra.mxu0 0.0
        %1371 = vmatpush.xpose.msra.mxu0 0.0
        %1372 = vmatpush.xpose.msra.mxu0 0.0
        %1373 = vmatpush.xpose.msra.mxu0 0.0
        %1374 = vmatpush.xpose.msra.mxu0 0.0
        %1375 = vmatpush.xpose.msra.mxu0 0.0
        %1376 = vmatpush.xpose.msra.mxu0 %v1360
        %1377 = vmatpush.xpose.msra.mxu0 %v1358
        %1378 = vmatmul.f32.gmra.mxu0 %v1356
        %v1379 = vpop.f32.mrf.mxu0
        %v1380 = vadd.f32 0.0, %v1379
        %1381 = vdwg.mxu0
        %v1382 = vsel %vm1092, %v1380, -inf
        %1383 = vmax.xlane.f32.xlu0 %v1382
        %v1384 = vpop.xlane.xlu0 %1383
        %v1385 = vsub.f32 %v1380, %v1384
        %v1386 = vmul.f32 %v1385, 1.442695
        %v1387 = vpow.pop %v1386
        %v1388 = vsel %vm1092, %v1387, 0.0
        %1389 = vadd.xlane.f32.xlu0 %v1388
        %v1390 = vpop.xlane.xlu0 %1389
        %v1391 = vrcp.pop %v1390
        %v1392 = vmul.f32 %v1387, %v1391
        %1393 = vrot.lane.b32.xlu0 %v1058, 72
        %v1394 = vpop.permute.xlu0 %1393
        %1395 = vrot.lane.b32.xlu0 %v1061, 72
        %v1396 = vpop.permute.xlu0 %1395
        %v1400 = vsel %vm1092, %v1392, 0
        %1402 = vmatpush.msra.mxu0 0.0
        %1403 = vmatpush.msra.mxu0 0.0
        %1404 = vmatpush.msra.mxu0 0.0
        %1405 = vmatpush.msra.mxu0 0.0
        %1406 = vmatpush.msra.mxu0 0.0
        %1407 = vmatpush.msra.mxu0 0.0
        %1408 = vmatpush.msra.mxu0 0.0
        %1409 = vmatpush.msra.mxu0 0.0
        %1410 = vmatpush.msra.mxu0 0.0
        %1411 = vmatpush.msra.mxu0 0.0
        %1412 = vmatpush.msra.mxu0 0.0
        %1413 = vmatpush.msra.mxu0 0.0
        %1414 = vmatpush.msra.mxu0 0.0
        %1415 = vmatpush.msra.mxu0 0.0
        %1416 = vmatpush.msra.mxu0 %v1396
        %1417 = vmatpush.msra.mxu0 %v1394
        %1418 = vmatmul.f32.gmra.mxu0 %v1400
        %v1419 = vpop.f32.mrf.mxu0
        %v1420 = vadd.f32 0.0, %v1419
        %1421 = vdwg.mxu0
        %v1422 = vld [vmem:[#allocation8 + $0x18] sm:$0xff]
        %v1424 = vsel %vm607, %v1420, 0
        %1426 = vmatpush.msra.mxu0 0.0
        %1427 = vmatpush.msra.mxu0 0.0
        %1428 = vmatpush.msra.mxu0 0.0
        %1429 = vmatpush.msra.mxu0 0.0
        %1430 = vmatpush.msra.mxu0 0.0
        %1431 = vmatpush.msra.mxu0 0.0
        %1432 = vmatpush.msra.mxu0 0.0
        %1433 = vmatpush.msra.mxu0 0.0
        %1434 = vmatpush.msra.mxu0 0.0
        %1435 = vmatpush.msra.mxu0 0.0
        %1436 = vmatpush.msra.mxu0 0.0
        %1437 = vmatpush.msra.mxu0 0.0
        %1438 = vmatpush.msra.mxu0 0.0
        %1439 = vmatpush.msra.mxu0 0.0
        %1440 = vmatpush.msra.mxu0 0.0
        %1441 = vmatpush.msra.mxu0 %v1422
        %1442 = vmatmul.f32.gmra.mxu0 %v1424
        %v1443 = vpop.f32.mrf.mxu0
        %v1444 = vadd.f32 0.0, %v1443
        %1445 = vdwg.mxu0
        %v1446 = vadd.f32 %v1349, %v1444
        %v1447 = vperm.slane %v561, 2
        %v1448 = vadd.f32 %v1446, %v1447
        %v1449 = vadd.f32 %v997, %v1448
        %v1450 = vsel %vm574, %v1449, 0.0
        %1451 = vadd.xlane.f32.xlu0 %v1450
        %v1452 = vpop.xlane.xlu0 %1451
        %v1453 = vmul.f32 %v1452, %v974
        %v1454 = vsub.f32 %v1449, %v1453
        %v1455 = vmul.f32 %v1454, %v1454
        %v1456 = vsel %vm574, %v1455, 0.0
        %1457 = vadd.xlane.f32.xlu0 %v1456
        %v1458 = vpop.xlane.xlu0 %1457
        %v1459 = vmul.f32 %v1458, %v974
        %v1460 = vadd.f32 %v1459, 1e-05
        %v1461 = vrsqrt.pop %v1460
        %v1462 = vmul.f32 %v1461, %v1460
        %v1463 = vmul.f32 %v1462, %v1461
        %v1464 = vmul.f32 0.5, %v1463
        %v1465 = vsub.f32 1.5, %v1464
        %v1466 = vmul.f32 %v1461, %v1465
        %vm1467 = vweird.f32 %v1460
        %vm1468 = vweird.f32 %v1461
        %vm1469 = vmor %vm1467, %vm1468
        %v1470 = vsel %vm1469, %v1461, %v1466
        %v1471 = vmul.f32 %v1454, %v1470
        %v1472 = vperm.slane %v561, 6
        %v1473 = vmul.f32 %v1471, %v1472
        %v1474 = vperm.slane %v561, 7
        %v1475 = vadd.f32 %v1473, %v1474
        %v1476 = vld [vmem:[#allocation10] sm:$0xff]
        %v1477 = vld [vmem:[#allocation10 + $0x8] sm:$0xff]
        %v1478 = vld [vmem:[#allocation10 + $0x10] sm:$0xff]
        %v1479 = vld [vmem:[#allocation10 + $0x18] sm:$0xff]
        %v1480 = vld [vmem:[%s10] sm:$0x1]
        %v1482 = vperm.slane %v1480, 0
        %v1485 = vsel %vm574, %v1475, 0
        %1487 = vmatpush.msra.mxu0 0.0
        %1488 = vmatpush.msra.mxu0 0.0
        %1489 = vmatpush.msra.mxu0 0.0
        %1490 = vmatpush.msra.mxu0 0.0
        %1491 = vmatpush.msra.mxu0 0.0
        %1492 = vmatpush.msra.mxu0 0.0
        %1493 = vmatpush.msra.mxu0 0.0
        %1494 = vmatpush.msra.mxu0 0.0
        %1495 = vmatpush.msra.mxu0 0.0
        %1496 = vmatpush.msra.mxu0 0.0
        %1497 = vmatpush.msra.mxu0 0.0
        %1498 = vmatpush.msra.mxu0 0.0
        %1499 = vmatpush.msra.mxu0 %v1479
        %1500 = vmatpush.msra.mxu0 %v1478
        %1501 = vmatpush.msra.mxu0 %v1477
        %1502 = vmatpush.msra.mxu0 %v1476
        %1503 = vmatmul.f32.gmra.mxu0 %v1485
        %v1504 = vpop.f32.mrf.mxu0
        %v1505 = vadd.f32 %v1482, %v1504
        %1506 = vdwg.mxu0
        %v1507 = vmax.f32 %v1505, 0.0
        %v1508 = vld [vmem:[%s11] sm:$0xff]
        %v1509 = vld [vmem:[%s11 + $0x8] sm:$0xff]
        %v1510 = vld [vmem:[%s11 + $0x10] sm:$0xff]
        %v1511 = vld [vmem:[%s11 + $0x18] sm:$0xff]
        %v1512 = vld [vmem:[%s11 + $0x20] sm:$0xff]
        %v1513 = vld [vmem:[%s11 + $0x28] sm:$0xff]
        %v1514 = vld [vmem:[%s11 + $0x30] sm:$0xff]
        %v1515 = vld [vmem:[%s11 + $0x38] sm:$0xff]
        %v1516 = vperm.slane %v561, 3
        %vm1517 = vcmask 523264
        %v1519 = vsel %vm1517, %v1507, 0
        %1521 = vmatpush.msra.mxu0 0.0
        %1522 = vmatpush.msra.mxu0 0.0
        %1523 = vmatpush.msra.mxu0 0.0
        %1524 = vmatpush.msra.mxu0 0.0
        %1525 = vmatpush.msra.mxu0 0.0
        %1526 = vmatpush.msra.mxu0 0.0
        %1527 = vmatpush.msra.mxu0 0.0
        %1528 = vmatpush.msra.mxu0 0.0
        %1529 = vmatpush.msra.mxu0 %v1515
        %1530 = vmatpush.msra.mxu0 %v1514
        %1531 = vmatpush.msra.mxu0 %v1513
        %1532 = vmatpush.msra.mxu0 %v1512
        %1533 = vmatpush.msra.mxu0 %v1511
        %1534 = vmatpush.msra.mxu0 %v1510
        %1535 = vmatpush.msra.mxu0 %v1509
        %1536 = vmatpush.msra.mxu0 %v1508
        %1537 = vmatmul.f32.gmra.mxu0 %v1519
        %v1538 = vpop.f32.mrf.mxu0
        %v1539 = vadd.f32 %v1516, %v1538
        %1540 = vdwg.mxu0
        %v1541 = vadd.f32 %v1475, %v1539
        %v1542 = vsel %vm574, %v1541, 0.0
        %1543 = vadd.xlane.f32.xlu0 %v1542
        %v1544 = vpop.xlane.xlu0 %1543
        %v1545 = vmul.f32 %v1544, %v974
        %v1546 = vsub.f32 %v1541, %v1545
        %v1547 = vmul.f32 %v1546, %v1546
        %v1548 = vsel %vm574, %v1547, 0.0
        %1549 = vadd.xlane.f32.xlu0 %v1548
        %v1550 = vpop.xlane.xlu0 %1549
        %v1551 = vmul.f32 %v1550, %v974
        %v1552 = vadd.f32 %v1551, 1e-05
        %v1553 = vrsqrt.pop %v1552
        %v1554 = vmul.f32 %v1553, %v1552
        %v1555 = vmul.f32 %v1554, %v1553
        %v1556 = vmul.f32 0.5, %v1555
        %v1557 = vsub.f32 1.5, %v1556
        %v1558 = vmul.f32 %v1553, %v1557
        %vm1559 = vweird.f32 %v1552
        %vm1560 = vweird.f32 %v1553
        %vm1561 = vmor %vm1559, %vm1560
        %v1562 = vsel %vm1561, %v1553, %v1558
        %v1563 = vmul.f32 %v1546, %v1562
        %v1564 = vperm.slane %v562, 0
        %v1565 = vmul.f32 %v1563, %v1564
        %v1566 = vperm.slane %v562, 1
        %v1567 = vadd.f32 %v1565, %v1566
        %1568 = vst.msk [vmem:[%s555] sm:$0xff] %vm574, %v1567
        %s1569 = sand.u32 %s324, 1
        %s1570 = scalar_lea.sflag [#allocation4], %s1569
        %s1571 = sand.u32 %s324, 1
        %s1572 = smul.addr %s1571, 8
        %s1573 = scalar_lea.vmem [#allocation13], %s1572
        // Predicated region
        $region97: #{tpu_custom_call.1} parent=71 // pred_check
          %p1574 = pneg %p334
        $region98: #{tpu_custom_call.1} parent=71 // pred_check_branch
          %1576 = sbr.rel (%p1574) target = $region100
        $region99: #{tpu_custom_call.1} parent=71 // pred_region
          %1578 = vsyncadd %s1570, 0
          %s1579 = smul.addr %s33, 8
          %s1580 = scalar_lea.hbm %s13, %s1579
          %s1582 = sshll.u32 %s1573, 4
          %s1583 = int_to_ptr.vmem [resolvable:$true] %s1582
          %s1584 = sshll.u32 %s1580, 4
          %s1585 = int_to_ptr.hbm [resolvable:$true] %s1584
          %1587 = dma.vmem_to_hbm [thread:$0]  %s1583, 128, %s1585, %s1570
        $region100: #{tpu_custom_call.1} parent=71 // pred_fallthru
          _
      $region72: #{tpu_custom_call.1} parent=5 // pred_fallthru
        _
      %p1588 = scmp.le.s32.totalorder 2, %s28
      // Predicated region
      $region101: #{tpu_custom_call.1} parent=5 // pred_check
        %p1589 = pneg %p1588
      $region102: #{tpu_custom_call.1} parent=5 // pred_check_branch
        %1591 = sbr.rel (%p1589) target = $region104
      $region103: #{tpu_custom_call.1} parent=5 // pred_region
        %s1592 = ssub.s32 %s28, 2
        // Predicated region
        $region105: #{tpu_custom_call.1} parent=103 // pred_check
          %p1593 = pneg %p340
        $region106: #{tpu_custom_call.1} parent=103 // pred_check_branch
          %1595 = sbr.rel (%p1593) target = $region108
        $region107: #{tpu_custom_call.1} parent=103 // pred_region
          %s1596 = sand.u32 %s325, 1
          %s1597 = scalar_lea.sflag [#allocation4], %s1596
          %s1598 = sand.u32 %s325, 1
          %s1599 = smul.addr %s1598, 8
          %s1600 = scalar_lea.vmem [#allocation13], %s1599
          %1602 = dma.done %s1597, 128
        $region108: #{tpu_custom_call.1} parent=103 // pred_fallthru
          _
      $region104: #{tpu_custom_call.1} parent=5 // pred_fallthru
        _
    $region6: #{tpu_custom_call.1} parent=1 // loop_footer
      %s32 = sadd.s32 1, %s28
    $region7: #{tpu_custom_call.1} parent=1 // loop_footer_branch
      %27 = sbr.rel target = $region3
    $region8: #{tpu_custom_call.1} parent=1 // loop_exit
      _
    %1603 = vsyncpa [#allocation3], 1
    %s1604 = scalar_lea.sflag [#allocation3], 1
    %1605 = vsyncpa %s1604, 1
    %1606 = vsyncpa [#allocation6], 1
    %1607 = vsyncpa [#allocation9], 1
    %1608 = vsyncpa [#allocation12], 1
    %1609 = vsyncpa [#allocation4], 1
    %s1610 = scalar_lea.sflag [#allocation4], 1
    %1611 = vsyncpa %s1610, 1

</llo_original>
